<compile_context>
chip_gen: v6e
topology: v6e:2x2x1
jax: 0.10.0
libtpu: 0.0.40
codegen_flags: <defaults>
</compile_context>

<pallas_src>
import functools

import jax
import jax.numpy as jnp
from jax import lax
from jax.experimental import pallas as pl
from jax.experimental.pallas import tpu as pltpu


def _round_up(x, m):
    return ((x + m - 1) // m) * m


# ---------------------------------------------------------------------------
# Fused kernel: shared MLPs + global max-pool (tiled over points) + head.
# ---------------------------------------------------------------------------
def _pointnet_fused_kernel(
        # scalar prefetch (SMEM)
        t_sref,
        # tensor inputs (VMEM)
        x_ref, w1_ref, b1_ref, w2_ref, b2_ref,
        wt1_ref, bt1_ref, wt2_ref, bt2_ref,
        wfcx_ref, wfct_ref, bfc_ref,
        wd1_ref, bd1_ref, wd2_ref, bd2_ref,
        # output
        out_ref,
        # scratch
        acc_ref,
        *, n_valid, tile_n, needs_mask):
    b = pl.program_id(0)
    k = pl.program_id(1)

    @pl.when(k == 0)
    def _():
        acc_ref[...] = jnp.full(acc_ref.shape, -jnp.inf, acc_ref.dtype)

    x = x_ref[0]                                               # (TN, 3) f32

    # Layer 1 (Conv1d 3->64, k=1) on the VPU.  A K=3 contraction wastes the
    # MXU and would force a weight switch between W1 and W2 every tile; three
    # FMAs per output vreg are cheaper and keep x in f32.
    w1 = w1_ref[...]                                           # (3, 64) f32
    h = (x[:, 0:1] * w1[0:1, :]
         + x[:, 1:2] * w1[1:2, :]
         + x[:, 2:3] * w1[2:3, :]
         + b1_ref[...])
    h = jnp.maximum(h, 0.0)                                    # (TN, 64) f32

    # Layer 2 (Conv1d 64->128, k=1) on the MXU, bf16 inputs / f32 accumulation.
    h2 = jnp.dot(h.astype(w2_ref.dtype), w2_ref[...],
                 preferred_element_type=jnp.float32) + b2_ref[...]
    h2 = jnp.maximum(h2, 0.0)                                  # (TN, 128) f32

    if needs_mask:
        # Padded rows (point index >= n_valid) must not win the max.
        row = k * tile_n + lax.broadcasted_iota(jnp.int32, (tile_n, 1), 0)
        h2 = jnp.where(row < n_valid, h2, -jnp.inf)

    # Running max over point tiles.  Collapse the tile to one (8, 128) vreg
    # with pure elementwise maxes (VPU); the cross-sublane collapse is
    # deferred to the epilogue (one XLU reduce per batch element, not per tile).
    part = jnp.max(h2.reshape(tile_n // 8, 8, 128), axis=0)    # (8, 128)
    acc_ref[...] = jnp.maximum(acc_ref[...], part)

    @pl.when(k == pl.num_programs(1) - 1)
    def _():
        x_global = jnp.max(acc_ref[...], axis=0, keepdims=True)       # (1, 128)

        # t embedding: Linear(1->64) + ReLU is a scalar*vector (K=1 matmul
        # would waste an MXU push), then Linear(64->128).
        t_val = t_sref[b]
        th = jnp.maximum(t_val * wt1_ref[...] + bt1_ref[...], 0.0)    # (1, 64)
        t_feat = (jnp.dot(th, wt2_ref[...], preferred_element_type=jnp.float32)
                  + bt2_ref[...])                                     # (1, 128)

        # fc(concat([x_global, t_feat])) == x_global@Wfc[:128] + t_feat@Wfc[128:]
        f = (jnp.dot(x_global, wfcx_ref[...], preferred_element_type=jnp.float32)
             + jnp.dot(t_feat, wfct_ref[...], preferred_element_type=jnp.float32)
             + bfc_ref[...])
        f = jnp.maximum(f, 0.0)                                       # (1, H)

        d = jnp.maximum(
            jnp.dot(f, wd1_ref[...], preferred_element_type=jnp.float32)
            + bd1_ref[...], 0.0)                                      # (1, H)
        out_ref[0] = (jnp.dot(d, wd2_ref[...], preferred_element_type=jnp.float32)
                      + bd2_ref[...])                                 # (1, 3)


# ---------------------------------------------------------------------------
# Wrapper
# ---------------------------------------------------------------------------
_DEFAULT_MAX_TILE = 2048   # safe on v5e's 16 MiB default scoped VMEM; 4096 also
                           # fits v6e/v7x comfortably if more overlap is wanted.


def _const_spec(arr):
    nd = arr.ndim
    return pl.BlockSpec(arr.shape, lambda *_, _nd=nd: (0,) * _nd)


def diffusion_pointnet_forward(x, t, params, *, tile_n=None, use_bf16=True):
    """x: (B, N, 3) f32, t: (B,) int -> (B, N, 3) f32."""
    B, N, C = x.shape
    assert C == 3

    if tile_n is None:
        tile_n = min(_DEFAULT_MAX_TILE, _round_up(N, 8))
    tile_n = max(8, _round_up(tile_n, 8))

    # Pad the point axis to a multiple of the tile; padded rows are masked to
    # -inf in-kernel before the max, so VMEM stays bounded by the tile.
    n_pad = _round_up(N, tile_n)
    n_tiles = n_pad // tile_n
    if n_pad != N:
        x = jnp.pad(x, ((0, 0), (0, n_pad - N), (0, 0)))

    mlp_dtype = jnp.bfloat16 if use_bf16 else jnp.float32
    w1, b1 = params["w1"], params["b1"]                      # layer 1 stays f32 (VPU)
    w2, b2 = params["w2"].astype(mlp_dtype), params["b2"]    # layer 2 on MXU in bf16
    wfc_x = params["wfc"][:128]
    wfc_t = params["wfc"][128:]

    t_f = t.astype(jnp.float32)                              # (B,) scalar prefetch

    kernel = functools.partial(
        _pointnet_fused_kernel,
        n_valid=N, tile_n=tile_n, needs_mask=(n_pad != N))

    tensor_inputs = [
        x, w1, b1, w2, b2,
        params["wt1"], params["bt1"], params["wt2"], params["bt2"],
        wfc_x, wfc_t, params["bfc"],
        params["wd1"], params["bd1"], params["wd2"], params["bd2"],
    ]
    in_specs = [pl.BlockSpec((1, tile_n, 3), lambda b, k, t_ref: (b, k, 0))]
    in_specs += [_const_spec(a) for a in tensor_inputs[1:]]

    d3 = pl.pallas_call(
        kernel,
        out_shape=jax.ShapeDtypeStruct((B, 1, 3), jnp.float32),
        grid_spec=pltpu.PrefetchScalarGridSpec(
            num_scalar_prefetch=1,
            grid=(B, n_tiles),
            in_specs=in_specs,
            out_specs=pl.BlockSpec((1, 1, 3), lambda b, k, t_ref: (b, 0, 0)),
            scratch_shapes=[pltpu.VMEM((8, 128), jnp.float32)],
        ),
        compiler_params=pltpu.CompilerParams(
            dimension_semantics=("parallel", "arbitrary")),
    )(t_f, *tensor_inputs)

    d = d3.reshape(B, 3)
    # d.unsqueeze(1).expand(-1, N, 3): free broadcast, kept for output parity.
    return jnp.broadcast_to(d[:, None, :], (B, N, 3))


# ---------------------------------------------------------------------------
# Parameters & pure-JAX reference
# ---------------------------------------------------------------------------
def init_params(key, hidden_dim=32):
    """Deterministic synthetic parameters. Shapes follow the PyTorch module,
    stored as (in, out) so kernels compute x @ W + b (== torch x @ W.T + b)."""
    ks = jax.random.split(key, 14)
    s = 0.1

    def w(k, shape):
        return jax.random.normal(k, shape, jnp.float32) * s

    return {
        "w1":  w(ks[0],  (3, 64)),           "b1":  w(ks[1],  (1, 64)),
        "w2":  w(ks[2],  (64, 128)),         "b2":  w(ks[3],  (1, 128)),
        "wt1": w(ks[4],  (1, 64)),           "bt1": w(ks[5],  (1, 64)),
        "wt2": w(ks[6],  (64, 128)),         "bt2": w(ks[7],  (1, 128)),
        "wfc": w(ks[8],  (256, hidden_dim)), "bfc": w(ks[9],  (1, hidden_dim)),
        "wd1": w(ks[10], (hidden_dim, hidden_dim)), "bd1": w(ks[11], (1, hidden_dim)),
        "wd2": w(ks[12], (hidden_dim, 3)),   "bd2": w(ks[13], (1, 3)),
    }


def reference_forward(x, t, params):
    """Pure-JAX f32 reference mirroring the PyTorch forward."""
    B, N, _ = x.shape
    h = jax.nn.relu(x @ params["w1"] + params["b1"])          # (B, N, 64)
    h = jax.nn.relu(h @ params["w2"] + params["b2"])          # (B, N, 128)
    x_global = jnp.max(h, axis=1)                             # (B, 128)
    tf = t.astype(jnp.float32)[:, None]                       # (B, 1)
    th = jax.nn.relu(tf @ params["wt1"] + params["bt1"])      # (B, 64)
    t_feat = th @ params["wt2"] + params["bt2"]               # (B, 128)
    feat = jnp.concatenate([x_global, t_feat], axis=-1)       # (B, 256)
    f = jax.nn.relu(feat @ params["wfc"] + params["bfc"])
    d = jax.nn.relu(f @ params["wd1"] + params["bd1"])
    d = d @ params["wd2"] + params["bd2"]                     # (B, 3)
    return jnp.broadcast_to(d[:, None, :], (B, N, 3))


if __name__ == "__main__":
    B, N, hidden_dim = 2, 16, 32
    key = jax.random.PRNGKey(0)
    kx, kt, kp, kx2 = jax.random.split(key, 4)

    x = jax.random.normal(kx, (B, N, 3), jnp.float32)
    t = jax.random.randint(kt, (B,), 0, 1000, jnp.int32)
    params = init_params(kp, hidden_dim=hidden_dim)

    # tile_n=8 so the toy N=16 exercises the tiled running-max path (2 tiles).
    out = jax.block_until_ready(diffusion_pointnet_forward(x, t, params, tile_n=8))
    ref = jax.block_until_ready(reference_forward(x, t, params))
    assert out.shape == (B, N, 3)
    # Only the 64->128 matmul is bf16 (f32 accumulation); everything else f32.
    assert jnp.allclose(out, ref, atol=2e-2, rtol=2e-2), (
        f"max abs err {float(jnp.max(jnp.abs(out - ref)))}")

    # Exercise the pad + (-inf) mask fallback: N not a multiple of the tile.
    N2 = 13
    x2 = jax.random.normal(kx2, (B, N2, 3), jnp.float32)
    out2 = jax.block_until_ready(diffusion_pointnet_forward(x2, t, params, tile_n=8))
    ref2 = jax.block_until_ready(reference_forward(x2, t, params))
    assert out2.shape == (B, N2, 3)
    assert jnp.allclose(out2, ref2, atol=2e-2, rtol=2e-2), (
        f"max abs err {float(jnp.max(jnp.abs(out2 - ref2)))}")

    print("KERNEL_OK")
</pallas_src>

<mosaic_0001>
module attributes {stable_mosaic.version = 11 : i64} {
  func.func @_pointnet_fused_kernel(%arg0: i32, %arg1: i32, %arg2: memref<2xf32, #tpu.memory_space<smem>>, %arg3: memref<1x8x3xf32, #tpu.memory_space<vmem>>, %arg4: memref<3x64xf32, #tpu.memory_space<vmem>>, %arg5: memref<1x64xf32, #tpu.memory_space<vmem>>, %arg6: memref<64x128xbf16, #tpu.memory_space<vmem>>, %arg7: memref<1x128xf32, #tpu.memory_space<vmem>>, %arg8: memref<1x64xf32, #tpu.memory_space<vmem>>, %arg9: memref<1x64xf32, #tpu.memory_space<vmem>>, %arg10: memref<64x128xf32, #tpu.memory_space<vmem>>, %arg11: memref<1x128xf32, #tpu.memory_space<vmem>>, %arg12: memref<128x32xf32, #tpu.memory_space<vmem>>, %arg13: memref<128x32xf32, #tpu.memory_space<vmem>>, %arg14: memref<1x32xf32, #tpu.memory_space<vmem>>, %arg15: memref<32x32xf32, #tpu.memory_space<vmem>>, %arg16: memref<1x32xf32, #tpu.memory_space<vmem>>, %arg17: memref<32x3xf32, #tpu.memory_space<vmem>>, %arg18: memref<1x3xf32, #tpu.memory_space<vmem>>, %arg19: memref<1x1x3xf32, #tpu.memory_space<vmem>>, %arg20: memref<8x128xf32, #tpu.memory_space<vmem>>) attributes {dimension_semantics = [#tpu.dimension_semantics<parallel>, #tpu.dimension_semantics<arbitrary>], iteration_bounds = array<i64: 2, 2>, scalar_prefetch = 1 : i64, scratch_operands = 1 : i64, tpu.core_type = #tpu.core_type<tc>, window_params = [{transform_indices = @transform_0, window_bounds = array<i64: 1, 8, 3>}, {pipeline_mode = #tpu.pipeline_mode<synchronous>, transform_indices = @transform_1, window_bounds = array<i64: 3, 64>}, {pipeline_mode = #tpu.pipeline_mode<synchronous>, transform_indices = @transform_2, window_bounds = array<i64: 1, 64>}, {pipeline_mode = #tpu.pipeline_mode<synchronous>, transform_indices = @transform_3, window_bounds = array<i64: 64, 128>}, {pipeline_mode = #tpu.pipeline_mode<synchronous>, transform_indices = @transform_4, window_bounds = array<i64: 1, 128>}, {pipeline_mode = #tpu.pipeline_mode<synchronous>, transform_indices = @transform_5, window_bounds = array<i64: 1, 64>}, {pipeline_mode = #tpu.pipeline_mode<synchronous>, transform_indices = @transform_6, window_bounds = array<i64: 1, 64>}, {pipeline_mode = #tpu.pipeline_mode<synchronous>, transform_indices = @transform_7, window_bounds = array<i64: 64, 128>}, {pipeline_mode = #tpu.pipeline_mode<synchronous>, transform_indices = @transform_8, window_bounds = array<i64: 1, 128>}, {pipeline_mode = #tpu.pipeline_mode<synchronous>, transform_indices = @transform_9, window_bounds = array<i64: 128, 32>}, {pipeline_mode = #tpu.pipeline_mode<synchronous>, transform_indices = @transform_10, window_bounds = array<i64: 128, 32>}, {pipeline_mode = #tpu.pipeline_mode<synchronous>, transform_indices = @transform_11, window_bounds = array<i64: 1, 32>}, {pipeline_mode = #tpu.pipeline_mode<synchronous>, transform_indices = @transform_12, window_bounds = array<i64: 32, 32>}, {pipeline_mode = #tpu.pipeline_mode<synchronous>, transform_indices = @transform_13, window_bounds = array<i64: 1, 32>}, {pipeline_mode = #tpu.pipeline_mode<synchronous>, transform_indices = @transform_14, window_bounds = array<i64: 32, 3>}, {pipeline_mode = #tpu.pipeline_mode<synchronous>, transform_indices = @transform_15, window_bounds = array<i64: 1, 3>}, {transform_indices = @transform_16, window_bounds = array<i64: 1, 1, 3>}]} {
    %c0_i32 = arith.constant 0 : i32
    %0 = arith.cmpi eq, %arg1, %c0_i32 : i32
    %1 = arith.extui %0 : i1 to i32
    %c0_i32_0 = arith.constant 0 : i32
    %2 = arith.cmpi ne, %1, %c0_i32_0 : i32
    scf.if %2 {
      %cst_19 = arith.constant 0xFF800000 : f32
      %44 = vector.broadcast %cst_19 : f32 to vector<8x128xf32>
      %c0_20 = arith.constant 0 : index
      %c0_21 = arith.constant 0 : index
      %45 = vector.load %arg20[%c0_20, %c0_21] : memref<8x128xf32, #tpu.memory_space<vmem>>, vector<8x128xf32>
      tpu.vector_store %arg20[%c0_20, %c0_21], %44 {strides = array<i32>} : memref<8x128xf32, #tpu.memory_space<vmem>>, vector<8x128xf32>,
    } else {
    }
    %c0 = arith.constant 0 : index
    %c0_1 = arith.constant 0 : index
    %c0_2 = arith.constant 0 : index
    %3 = vector.load %arg3[%c0, %c0_1, %c0_2] : memref<1x8x3xf32, #tpu.memory_space<vmem>>, vector<1x8x3xf32>
    %4 = vector.shape_cast %3 : vector<1x8x3xf32> to vector<8x3xf32>
    %c0_3 = arith.constant 0 : index
    %c0_4 = arith.constant 0 : index
    %5 = vector.load %arg4[%c0_3, %c0_4] : memref<3x64xf32, #tpu.memory_space<vmem>>, vector<3x64xf32>
    %6 = vector.extract_strided_slice %4 {offsets = [0, 0], sizes = [8, 1], strides = [1, 1]} : vector<8x3xf32> to vector<8x1xf32>
    %7 = vector.extract_strided_slice %5 {offsets = [0, 0], sizes = [1, 64], strides = [1, 1]} : vector<3x64xf32> to vector<1x64xf32>
    %8 = vector.broadcast %6 : vector<8x1xf32> to vector<8x64xf32>
    %9 = vector.broadcast %7 : vector<1x64xf32> to vector<8x64xf32>
    %10 = arith.mulf %8, %9 : vector<8x64xf32>
    %11 = vector.extract_strided_slice %4 {offsets = [0, 1], sizes = [8, 1], strides = [1, 1]} : vector<8x3xf32> to vector<8x1xf32>
    %12 = vector.extract_strided_slice %5 {offsets = [1, 0], sizes = [1, 64], strides = [1, 1]} : vector<3x64xf32> to vector<1x64xf32>
    %13 = vector.broadcast %11 : vector<8x1xf32> to vector<8x64xf32>
    %14 = vector.broadcast %12 : vector<1x64xf32> to vector<8x64xf32>
    %15 = arith.mulf %13, %14 : vector<8x64xf32>
    %16 = arith.addf %10, %15 : vector<8x64xf32>
    %17 = vector.extract_strided_slice %4 {offsets = [0, 2], sizes = [8, 1], strides = [1, 1]} : vector<8x3xf32> to vector<8x1xf32>
    %18 = vector.extract_strided_slice %5 {offsets = [2, 0], sizes = [1, 64], strides = [1, 1]} : vector<3x64xf32> to vector<1x64xf32>
    %19 = vector.broadcast %17 : vector<8x1xf32> to vector<8x64xf32>
    %20 = vector.broadcast %18 : vector<1x64xf32> to vector<8x64xf32>
    %21 = arith.mulf %19, %20 : vector<8x64xf32>
    %22 = arith.addf %16, %21 : vector<8x64xf32>
    %c0_5 = arith.constant 0 : index
    %c0_6 = arith.constant 0 : index
    %23 = vector.load %arg5[%c0_5, %c0_6] : memref<1x64xf32, #tpu.memory_space<vmem>>, vector<1x64xf32>
    %24 = vector.broadcast %23 : vector<1x64xf32> to vector<8x64xf32>
    %25 = arith.addf %22, %24 : vector<8x64xf32>
    %cst = arith.constant 0.000000e+00 : f32
    %26 = vector.broadcast %cst : f32 to vector<8x64xf32>
    %27 = arith.maximumf %25, %26 : vector<8x64xf32>
    %28 = arith.truncf %27 : vector<8x64xf32> to vector<8x64xbf16>
    %c0_7 = arith.constant 0 : index
    %c0_8 = arith.constant 0 : index
    %29 = vector.load %arg6[%c0_7, %c0_8] : memref<64x128xbf16, #tpu.memory_space<vmem>>, vector<64x128xbf16>
    %cst_9 = arith.constant dense<0.000000e+00> : vector<8x128xf32>
    %30 = tpu.matmul %28, %29, %cst_9 {dimension_numbers = #tpu.dot_dimension_numbers<[1], [0], [0], [1], [0, 0, 1, 1], [], []>} : vector<8x64xbf16>, vector<64x128xbf16>, vector<8x128xf32> -> vector<8x128xf32>
    %c0_10 = arith.constant 0 : index
    %c0_11 = arith.constant 0 : index
    %31 = vector.load %arg7[%c0_10, %c0_11] : memref<1x128xf32, #tpu.memory_space<vmem>>, vector<1x128xf32>
    %32 = vector.broadcast %31 : vector<1x128xf32> to vector<8x128xf32>
    %33 = arith.addf %30, %32 : vector<8x128xf32>
    %cst_12 = arith.constant 0.000000e+00 : f32
    %34 = vector.broadcast %cst_12 : f32 to vector<8x128xf32>
    %35 = arith.maximumf %33, %34 : vector<8x128xf32>
    %36 = vector.shape_cast %35 : vector<8x128xf32> to vector<1x8x128xf32>
    %cst_13 = arith.constant dense<0xFF800000> : vector<8x128xf32>
    %37 = vector.multi_reduction <maximumf>, %36, %cst_13 [0] : vector<1x8x128xf32> to vector<8x128xf32>
    %c0_14 = arith.constant 0 : index
    %c0_15 = arith.constant 0 : index
    %38 = vector.load %arg20[%c0_14, %c0_15] : memref<8x128xf32, #tpu.memory_space<vmem>>, vector<8x128xf32>
    %39 = arith.maximumf %38, %37 : vector<8x128xf32>
    %c0_16 = arith.constant 0 : index
    %c0_17 = arith.constant 0 : index
    %40 = vector.load %arg20[%c0_16, %c0_17] : memref<8x128xf32, #tpu.memory_space<vmem>>, vector<8x128xf32>
    tpu.vector_store %arg20[%c0_16, %c0_17], %39 {strides = array<i32>} : memref<8x128xf32, #tpu.memory_space<vmem>>, vector<8x128xf32>,
    %c1_i32 = arith.constant 1 : i32
    %41 = arith.cmpi eq, %arg1, %c1_i32 : i32
    %42 = arith.extui %41 : i1 to i32
    %c0_i32_18 = arith.constant 0 : i32
    %43 = arith.cmpi ne, %42, %c0_i32_18 : i32
    scf.if %43 {
      %c0_19 = arith.constant 0 : index
      %c0_20 = arith.constant 0 : index
      %44 = vector.load %arg20[%c0_19, %c0_20] : memref<8x128xf32, #tpu.memory_space<vmem>>, vector<8x128xf32>
      %cst_21 = arith.constant dense<0xFF800000> : vector<128xf32>
      %45 = vector.multi_reduction <maximumf>, %44, %cst_21 [0] : vector<8x128xf32> to vector<128xf32>
      %46 = vector.shape_cast %45 : vector<128xf32> to vector<1x128xf32>
      %47 = arith.index_cast %arg0 : i32 to index
      %48 = memref.load %arg2[%47] : memref<2xf32, #tpu.memory_space<smem>>
      %c0_22 = arith.constant 0 : index
      %c0_23 = arith.constant 0 : index
      %49 = vector.load %arg8[%c0_22, %c0_23] : memref<1x64xf32, #tpu.memory_space<vmem>>, vector<1x64xf32>
      %50 = vector.broadcast %48 : f32 to vector<1x64xf32>
      %51 = arith.mulf %50, %49 : vector<1x64xf32>
      %c0_24 = arith.constant 0 : index
      %c0_25 = arith.constant 0 : index
      %52 = vector.load %arg9[%c0_24, %c0_25] : memref<1x64xf32, #tpu.memory_space<vmem>>, vector<1x64xf32>
      %53 = arith.addf %51, %52 : vector<1x64xf32>
      %cst_26 = arith.constant 0.000000e+00 : f32
      %54 = vector.broadcast %cst_26 : f32 to vector<1x64xf32>
      %55 = arith.maximumf %53, %54 : vector<1x64xf32>
      %c0_27 = arith.constant 0 : index
      %c0_28 = arith.constant 0 : index
      %56 = vector.load %arg10[%c0_27, %c0_28] : memref<64x128xf32, #tpu.memory_space<vmem>>, vector<64x128xf32>
      %cst_29 = arith.constant dense<0.000000e+00> : vector<1x128xf32>
      %57 = tpu.matmul %55, %56, %cst_29 {dimension_numbers = #tpu.dot_dimension_numbers<[1], [0], [0], [1], [0, 0, 1, 1], [], []>} : vector<1x64xf32>, vector<64x128xf32>, vector<1x128xf32> -> vector<1x128xf32>
      %c0_30 = arith.constant 0 : index
      %c0_31 = arith.constant 0 : index
      %58 = vector.load %arg11[%c0_30, %c0_31] : memref<1x128xf32, #tpu.memory_space<vmem>>, vector<1x128xf32>
      %59 = arith.addf %57, %58 : vector<1x128xf32>
      %c0_32 = arith.constant 0 : index
      %c0_33 = arith.constant 0 : index
      %60 = vector.load %arg12[%c0_32, %c0_33] : memref<128x32xf32, #tpu.memory_space<vmem>>, vector<128x32xf32>
      %cst_34 = arith.constant dense<0.000000e+00> : vector<1x32xf32>
      %61 = tpu.matmul %46, %60, %cst_34 {dimension_numbers = #tpu.dot_dimension_numbers<[1], [0], [0], [1], [0, 0, 1, 1], [], []>} : vector<1x128xf32>, vector<128x32xf32>, vector<1x32xf32> -> vector<1x32xf32>
      %c0_35 = arith.constant 0 : index
      %c0_36 = arith.constant 0 : index
      %62 = vector.load %arg13[%c0_35, %c0_36] : memref<128x32xf32, #tpu.memory_space<vmem>>, vector<128x32xf32>
      %cst_37 = arith.constant dense<0.000000e+00> : vector<1x32xf32>
      %63 = tpu.matmul %59, %62, %cst_37 {dimension_numbers = #tpu.dot_dimension_numbers<[1], [0], [0], [1], [0, 0, 1, 1], [], []>} : vector<1x128xf32>, vector<128x32xf32>, vector<1x32xf32> -> vector<1x32xf32>
      %64 = arith.addf %61, %63 : vector<1x32xf32>
      %c0_38 = arith.constant 0 : index
      %c0_39 = arith.constant 0 : index
      %65 = vector.load %arg14[%c0_38, %c0_39] : memref<1x32xf32, #tpu.memory_space<vmem>>, vector<1x32xf32>
      %66 = arith.addf %64, %65 : vector<1x32xf32>
      %cst_40 = arith.constant 0.000000e+00 : f32
      %67 = vector.broadcast %cst_40 : f32 to vector<1x32xf32>
      %68 = arith.maximumf %66, %67 : vector<1x32xf32>
      %c0_41 = arith.constant 0 : index
      %c0_42 = arith.constant 0 : index
      %69 = vector.load %arg15[%c0_41, %c0_42] : memref<32x32xf32, #tpu.memory_space<vmem>>, vector<32x32xf32>
      %cst_43 = arith.constant dense<0.000000e+00> : vector<1x32xf32>
      %70 = tpu.matmul %68, %69, %cst_43 {dimension_numbers = #tpu.dot_dimension_numbers<[1], [0], [0], [1], [0, 0, 1, 1], [], []>} : vector<1x32xf32>, vector<32x32xf32>, vector<1x32xf32> -> vector<1x32xf32>
      %c0_44 = arith.constant 0 : index
      %c0_45 = arith.constant 0 : index
      %71 = vector.load %arg16[%c0_44, %c0_45] : memref<1x32xf32, #tpu.memory_space<vmem>>, vector<1x32xf32>
      %72 = arith.addf %70, %71 : vector<1x32xf32>
      %cst_46 = arith.constant 0.000000e+00 : f32
      %73 = vector.broadcast %cst_46 : f32 to vector<1x32xf32>
      %74 = arith.maximumf %72, %73 : vector<1x32xf32>
      %c0_47 = arith.constant 0 : index
      %c0_48 = arith.constant 0 : index
      %75 = vector.load %arg17[%c0_47, %c0_48] : memref<32x3xf32, #tpu.memory_space<vmem>>, vector<32x3xf32>
      %cst_49 = arith.constant dense<0.000000e+00> : vector<1x3xf32>
      %76 = tpu.matmul %74, %75, %cst_49 {dimension_numbers = #tpu.dot_dimension_numbers<[1], [0], [0], [1], [0, 0, 1, 1], [], []>} : vector<1x32xf32>, vector<32x3xf32>, vector<1x3xf32> -> vector<1x3xf32>
      %c0_50 = arith.constant 0 : index
      %c0_51 = arith.constant 0 : index
      %77 = vector.load %arg18[%c0_50, %c0_51] : memref<1x3xf32, #tpu.memory_space<vmem>>, vector<1x3xf32>
      %78 = arith.addf %76, %77 : vector<1x3xf32>
      %c0_52 = arith.constant 0 : index
      %c0_53 = arith.constant 0 : index
      %c0_54 = arith.constant 0 : index
      %79 = vector.load %arg19[%c0_52, %c0_53, %c0_54] : memref<1x1x3xf32, #tpu.memory_space<vmem>>, vector<1x1x3xf32>
      %80 = vector.shape_cast %79 : vector<1x1x3xf32> to vector<1x3xf32>
      %81 = vector.shape_cast %78 : vector<1x3xf32> to vector<1x1x3xf32>
      tpu.vector_store %arg19[%c0_52, %c0_53, %c0_54], %81 {strides = array<i32>} : memref<1x1x3xf32, #tpu.memory_space<vmem>>, vector<1x1x3xf32>,
    } else {
    }
    return
  }
  func.func @transform_0(%arg0: i32, %arg1: i32, %arg2: memref<2xf32, #tpu.memory_space<smem>>) -> (i32, i32, i32) {
    %c0_i32 = arith.constant 0 : i32
    %c0_i32_0 = arith.constant 0 : i32
    return %arg0, %arg1, %c0_i32 : i32, i32, i32
  }
  func.func @transform_1(%arg0: i32, %arg1: i32, %arg2: memref<2xf32, #tpu.memory_space<smem>>) -> (i32, i32) {
    %c0_i32 = arith.constant 0 : i32
    %c0_i32_0 = arith.constant 0 : i32
    %c0_i32_1 = arith.constant 0 : i32
    return %c0_i32, %c0_i32_0 : i32, i32
  }
  func.func @transform_2(%arg0: i32, %arg1: i32, %arg2: memref<2xf32, #tpu.memory_space<smem>>) -> (i32, i32) {
    %c0_i32 = arith.constant 0 : i32
    %c0_i32_0 = arith.constant 0 : i32
    %c0_i32_1 = arith.constant 0 : i32
    return %c0_i32, %c0_i32_0 : i32, i32
  }
  func.func @transform_3(%arg0: i32, %arg1: i32, %arg2: memref<2xf32, #tpu.memory_space<smem>>) -> (i32, i32) {
    %c0_i32 = arith.constant 0 : i32
    %c0_i32_0 = arith.constant 0 : i32
    %c0_i32_1 = arith.constant 0 : i32
    return %c0_i32, %c0_i32_0 : i32, i32
  }
  func.func @transform_4(%arg0: i32, %arg1: i32, %arg2: memref<2xf32, #tpu.memory_space<smem>>) -> (i32, i32) {
    %c0_i32 = arith.constant 0 : i32
    %c0_i32_0 = arith.constant 0 : i32
    %c0_i32_1 = arith.constant 0 : i32
    return %c0_i32, %c0_i32_0 : i32, i32
  }
  func.func @transform_5(%arg0: i32, %arg1: i32, %arg2: memref<2xf32, #tpu.memory_space<smem>>) -> (i32, i32) {
    %c0_i32 = arith.constant 0 : i32
    %c0_i32_0 = arith.constant 0 : i32
    %c0_i32_1 = arith.constant 0 : i32
    return %c0_i32, %c0_i32_0 : i32, i32
  }
  func.func @transform_6(%arg0: i32, %arg1: i32, %arg2: memref<2xf32, #tpu.memory_space<smem>>) -> (i32, i32) {
    %c0_i32 = arith.constant 0 : i32
    %c0_i32_0 = arith.constant 0 : i32
    %c0_i32_1 = arith.constant 0 : i32
    return %c0_i32, %c0_i32_0 : i32, i32
  }
  func.func @transform_7(%arg0: i32, %arg1: i32, %arg2: memref<2xf32, #tpu.memory_space<smem>>) -> (i32, i32) {
    %c0_i32 = arith.constant 0 : i32
    %c0_i32_0 = arith.constant 0 : i32
    %c0_i32_1 = arith.constant 0 : i32
    return %c0_i32, %c0_i32_0 : i32, i32
  }
  func.func @transform_8(%arg0: i32, %arg1: i32, %arg2: memref<2xf32, #tpu.memory_space<smem>>) -> (i32, i32) {
    %c0_i32 = arith.constant 0 : i32
    %c0_i32_0 = arith.constant 0 : i32
    %c0_i32_1 = arith.constant 0 : i32
    return %c0_i32, %c0_i32_0 : i32, i32
  }
  func.func @transform_9(%arg0: i32, %arg1: i32, %arg2: memref<2xf32, #tpu.memory_space<smem>>) -> (i32, i32) {
    %c0_i32 = arith.constant 0 : i32
    %c0_i32_0 = arith.constant 0 : i32
    %c0_i32_1 = arith.constant 0 : i32
    return %c0_i32, %c0_i32_0 : i32, i32
  }
  func.func @transform_10(%arg0: i32, %arg1: i32, %arg2: memref<2xf32, #tpu.memory_space<smem>>) -> (i32, i32) {
    %c0_i32 = arith.constant 0 : i32
    %c0_i32_0 = arith.constant 0 : i32
    %c0_i32_1 = arith.constant 0 : i32
    return %c0_i32, %c0_i32_0 : i32, i32
  }
  func.func @transform_11(%arg0: i32, %arg1: i32, %arg2: memref<2xf32, #tpu.memory_space<smem>>) -> (i32, i32) {
    %c0_i32 = arith.constant 0 : i32
    %c0_i32_0 = arith.constant 0 : i32
    %c0_i32_1 = arith.constant 0 : i32
    return %c0_i32, %c0_i32_0 : i32, i32
  }
  func.func @transform_12(%arg0: i32, %arg1: i32, %arg2: memref<2xf32, #tpu.memory_space<smem>>) -> (i32, i32) {
    %c0_i32 = arith.constant 0 : i32
    %c0_i32_0 = arith.constant 0 : i32
    %c0_i32_1 = arith.constant 0 : i32
    return %c0_i32, %c0_i32_0 : i32, i32
  }
  func.func @transform_13(%arg0: i32, %arg1: i32, %arg2: memref<2xf32, #tpu.memory_space<smem>>) -> (i32, i32) {
    %c0_i32 = arith.constant 0 : i32
    %c0_i32_0 = arith.constant 0 : i32
    %c0_i32_1 = arith.constant 0 : i32
    return %c0_i32, %c0_i32_0 : i32, i32
  }
  func.func @transform_14(%arg0: i32, %arg1: i32, %arg2: memref<2xf32, #tpu.memory_space<smem>>) -> (i32, i32) {
    %c0_i32 = arith.constant 0 : i32
    %c0_i32_0 = arith.constant 0 : i32
    %c0_i32_1 = arith.constant 0 : i32
    return %c0_i32, %c0_i32_0 : i32, i32
  }
  func.func @transform_15(%arg0: i32, %arg1: i32, %arg2: memref<2xf32, #tpu.memory_space<smem>>) -> (i32, i32) {
    %c0_i32 = arith.constant 0 : i32
    %c0_i32_0 = arith.constant 0 : i32
    %c0_i32_1 = arith.constant 0 : i32
    return %c0_i32, %c0_i32_0 : i32, i32
  }
  func.func @transform_16(%arg0: i32, %arg1: i32, %arg2: memref<2xf32, #tpu.memory_space<smem>>) -> (i32, i32, i32) {
    %c0_i32 = arith.constant 0 : i32
    %c0_i32_0 = arith.constant 0 : i32
    %c0_i32_1 = arith.constant 0 : i32
    return %arg0, %c0_i32, %c0_i32_0 : i32, i32, i32
  }
}

</mosaic_0001>

<llo_original>
// kernel: tpu_custom_call.1
$region0: #{tpu_custom_call.1}
  #allocation0 [shape = 'u32[]', space=smem, size = 0x4, offset = 0x4, fixed_abs, tag = 'smem constant byte address 0x4 - core index']
  #allocation1 [shape = 'u32[144,128]{1,0:T(1,128)}', space=vmem, size = 0x12000, scoped, tag = 'internal scratch']
  #allocation2 [shape = 'f32[8,128]{1,0:T(8,128)}', space=vmem, size = 0x1000, scoped, tag = 'scratch operand']
  #allocation3 [shape = 's32[1]{0}', space=sflag, size = 0x4, scoped, tag = 'scoped memory for tpu_custom_call.1']
  #allocation4 [shape = 'u8[512]{0}', space=smem, size = 0x200, scoped, tag = 'prefetched SMEM operand 0']
  %s0 = inlined_call_operand.vmem [shape: f32[2], index: 0, kind: input, shape index: {}]
  %s1 = inlined_call_operand.vmem [shape: f32[2,16,3], index: 1, kind: input, shape index: {}]
  %s2 = inlined_call_operand.vmem [shape: f32[3,64], index: 2, kind: input, shape index: {}]
  %s3 = inlined_call_operand.vmem [shape: f32[1,64], index: 3, kind: input, shape index: {}]
  %s4 = inlined_call_operand.vmem [shape: bf16[64,128], index: 4, kind: input, shape index: {}]
  %s5 = inlined_call_operand.vmem [shape: f32[1,128], index: 5, kind: input, shape index: {}]
  %s6 = inlined_call_operand.vmem [shape: f32[1,64], index: 6, kind: input, shape index: {}]
  %s7 = inlined_call_operand.vmem [shape: f32[1,64], index: 7, kind: input, shape index: {}]
  %s8 = inlined_call_operand.vmem [shape: f32[64,128], index: 8, kind: input, shape index: {}]
  %s9 = inlined_call_operand.vmem [shape: f32[1,128], index: 9, kind: input, shape index: {}]
  %s10 = inlined_call_operand.vmem [shape: f32[128,32], index: 10, kind: input, shape index: {}]
  %s11 = inlined_call_operand.vmem [shape: f32[128,32], index: 11, kind: input, shape index: {}]
  %s12 = inlined_call_operand.vmem [shape: f32[1,32], index: 12, kind: input, shape index: {}]
  %s13 = inlined_call_operand.vmem [shape: f32[32,32], index: 13, kind: input, shape index: {}]
  %s14 = inlined_call_operand.vmem [shape: f32[1,32], index: 14, kind: input, shape index: {}]
  %s15 = inlined_call_operand.vmem [shape: f32[32,3], index: 15, kind: input, shape index: {}]
  %s16 = inlined_call_operand.vmem [shape: f32[1,3], index: 16, kind: input, shape index: {}]
  %s17 = inlined_call_operand.hbm [shape: f32[2,1,3], index: 17, kind: output, shape index: {}]
  %s18 = sld [smem:[#allocation0]]
  $region105: #{tpu_custom_call.1} parent=0
    _
  %s20 = ssub.s32 1, %s18
  %s21 = scalar_select 0, %s20, %s18
  %s22 = sshll.u32 %s0, 4
  %s23 = int_to_ptr.vmem [resolvable:$true] %s22
  %25 = dma.vmem_to_smem %s23, 16, [#allocation4], [#allocation3]
  %26 = dma.done [#allocation3], 16
  %27 = sfence
  $region1: #{tpu_custom_call.1} parent=0
    #allocation5 [shape = 'u8[1024]{0}', space=vmem, size = 0x400, scoped, tag = 'output window, operand 0']
    #allocation6 [shape = 's32[2]{0}', space=sflag, size = 0x8, scoped, tag = 'scoped memory for tpu_custom_call.1']
    %28 = vsyncpa [#allocation6], 0
    %s29 = scalar_lea.sflag [#allocation6], 1
    %30 = vsyncpa %s29, 0
    loop: start=0, step=1, limit=6
    $region2: #{tpu_custom_call.1} parent=1 // loop_pre_header
      _
    $region3: #{tpu_custom_call.1} parent=1 // loop_header
      %s32 = sphi 0, %s36
      %p33 = scmp.ge.s32.totalorder %s32, 6
      %s39 = sphi 0, %s51
      %s40 = sphi 0, %s47
      %s41 = sphi 0, %s39
      %s42 = sphi 0, %s40
      %s43 = sphi 0, %s41
      %s44 = sphi 0, %s42
      %s56 = sphi 0, %s58
      %s59 = sphi 0, %s56
      %s60 = sphi 0, %s59
      %s76 = sphi 0, %s60
      %s80 = sphi 0, %s80
      %s82 = sphi 0, %s80
      %s83 = sphi 0, %s82
      %s97 = sphi 0, %s83
      %s101 = sphi 0, %s101
      %s103 = sphi 0, %s101
      %s104 = sphi 0, %s103
      %s118 = sphi 0, %s104
      %s122 = sphi 0, %s122
      %s124 = sphi 0, %s122
      %s125 = sphi 0, %s124
      %s139 = sphi 0, %s125
      %s143 = sphi 0, %s143
      %s145 = sphi 0, %s143
      %s146 = sphi 0, %s145
      %s160 = sphi 0, %s146
      %s164 = sphi 0, %s164
      %s166 = sphi 0, %s164
      %s167 = sphi 0, %s166
      %s181 = sphi 0, %s167
      %s185 = sphi 0, %s185
      %s187 = sphi 0, %s185
      %s188 = sphi 0, %s187
      %s202 = sphi 0, %s188
      %s206 = sphi 0, %s206
      %s208 = sphi 0, %s206
      %s209 = sphi 0, %s208
      %s223 = sphi 0, %s209
      %s227 = sphi 0, %s227
      %s229 = sphi 0, %s227
      %s230 = sphi 0, %s229
      %s244 = sphi 0, %s230
      %s248 = sphi 0, %s248
      %s250 = sphi 0, %s248
      %s251 = sphi 0, %s250
      %s265 = sphi 0, %s251
      %s269 = sphi 0, %s269
      %s271 = sphi 0, %s269
      %s272 = sphi 0, %s271
      %s286 = sphi 0, %s272
      %s290 = sphi 0, %s290
      %s292 = sphi 0, %s290
      %s293 = sphi 0, %s292
      %s307 = sphi 0, %s293
      %s311 = sphi 0, %s311
      %s313 = sphi 0, %s311
      %s314 = sphi 0, %s313
      %s328 = sphi 0, %s314
      %s332 = sphi 0, %s332
      %s334 = sphi 0, %s332
      %s335 = sphi 0, %s334
      %s349 = sphi 0, %s335
      %s353 = sphi 0, %s353
      %s355 = sphi 0, %s353
      %s356 = sphi 0, %s355
      %s370 = sphi 0, %s356
      %s374 = sphi 0, %s374
      %s376 = sphi 0, %s374
      %s377 = sphi 0, %s376
      %s391 = sphi 0, %s377
      %s397 = sphi 0, %s399
      %s400 = sphi 0, %s397
      %s401 = sphi 0, %s400
      %s417 = sphi 0, %s401
    $region4: #{tpu_custom_call.1} parent=1 // loop_header_branch
      %35 = sbr.rel (%p33) target = $region8
    $region5: #{tpu_custom_call.1} parent=1 // loop_body
      %s37 = ssub.s32 %s32, 1
      %s38 = ssub.s32 %s32, 2
      %s45 = sadd.s32 1, %s40
      %p46 = scmp.ge.s32.totalorder %s45, 2
      %s47 = scalar_select %p46, 0, %s45
      %s48 = sadd.s32 1, %s39
      %s49 = scalar_select %p46, %s48, %s39
      %p50 = scmp.ge.s32.totalorder %s49, 2
      %s51 = scalar_select %p50, 0, %s49
      %s52 = ssub.s32 %s39, %s51
      %s53 = ssub.s32 %s40, %s47
      %s54 = sor.u32 %s52, %s53
      %p55 = scmp.eq.s32.totalorder %s54, 0
      %s57 = sadd.s32 %s56, 1
      %s58 = scalar_select %p55, %s56, %s57
      %p61 = pneg %p55
      %p62 = scmp.eq.s32.totalorder %s32, 3
      %p63 = por %p61, %p62
      %p64 = scmp.ne.s32.totalorder %s56, %s59
      %p65 = scmp.eq.s32.totalorder %s32, 0
      %p66 = por %p64, %p65
      %p67 = scmp.ne.s32.totalorder %s56, %s59
      %p68 = scmp.eq.s32.totalorder %s37, 3
      %p69 = por %p67, %p68
      %p70 = scmp.ne.s32.totalorder %s59, %s60
      %p71 = scmp.eq.s32.totalorder %s37, 0
      %p72 = por %p70, %p71
      %p73 = scmp.ne.s32.totalorder %s59, %s60
      %p74 = scmp.eq.s32.totalorder %s38, 3
      %p75 = por %p73, %p74
      %p77 = scmp.ne.s32.totalorder %s60, %s76
      %p78 = scmp.eq.s32.totalorder %s38, 0
      %p79 = por %p77, %p78
      %s81 = sadd.s32 %s80, 1
      %p84 = scmp.eq.s32.totalorder %s32, 3
      %p85 = scmp.ne.s32.totalorder %s80, %s82
      %p86 = scmp.eq.s32.totalorder %s32, 0
      %p87 = por %p85, %p86
      %p88 = scmp.ne.s32.totalorder %s80, %s82
      %p89 = scmp.eq.s32.totalorder %s37, 3
      %p90 = por %p88, %p89
      %p91 = scmp.ne.s32.totalorder %s82, %s83
      %p92 = scmp.eq.s32.totalorder %s37, 0
      %p93 = por %p91, %p92
      %p94 = scmp.ne.s32.totalorder %s82, %s83
      %p95 = scmp.eq.s32.totalorder %s38, 3
      %p96 = por %p94, %p95
      %p98 = scmp.ne.s32.totalorder %s83, %s97
      %p99 = scmp.eq.s32.totalorder %s38, 0
      %p100 = por %p98, %p99
      %s102 = sadd.s32 %s101, 1
      %p105 = scmp.eq.s32.totalorder %s32, 3
      %p106 = scmp.ne.s32.totalorder %s101, %s103
      %p107 = scmp.eq.s32.totalorder %s32, 0
      %p108 = por %p106, %p107
      %p109 = scmp.ne.s32.totalorder %s101, %s103
      %p110 = scmp.eq.s32.totalorder %s37, 3
      %p111 = por %p109, %p110
      %p112 = scmp.ne.s32.totalorder %s103, %s104
      %p113 = scmp.eq.s32.totalorder %s37, 0
      %p114 = por %p112, %p113
      %p115 = scmp.ne.s32.totalorder %s103, %s104
      %p116 = scmp.eq.s32.totalorder %s38, 3
      %p117 = por %p115, %p116
      %p119 = scmp.ne.s32.totalorder %s104, %s118
      %p120 = scmp.eq.s32.totalorder %s38, 0
      %p121 = por %p119, %p120
      %s123 = sadd.s32 %s122, 1
      %p126 = scmp.eq.s32.totalorder %s32, 3
      %p127 = scmp.ne.s32.totalorder %s122, %s124
      %p128 = scmp.eq.s32.totalorder %s32, 0
      %p129 = por %p127, %p128
      %p130 = scmp.ne.s32.totalorder %s122, %s124
      %p131 = scmp.eq.s32.totalorder %s37, 3
      %p132 = por %p130, %p131
      %p133 = scmp.ne.s32.totalorder %s124, %s125
      %p134 = scmp.eq.s32.totalorder %s37, 0
      %p135 = por %p133, %p134
      %p136 = scmp.ne.s32.totalorder %s124, %s125
      %p137 = scmp.eq.s32.totalorder %s38, 3
      %p138 = por %p136, %p137
      %p140 = scmp.ne.s32.totalorder %s125, %s139
      %p141 = scmp.eq.s32.totalorder %s38, 0
      %p142 = por %p140, %p141
      %s144 = sadd.s32 %s143, 1
      %p147 = scmp.eq.s32.totalorder %s32, 3
      %p148 = scmp.ne.s32.totalorder %s143, %s145
      %p149 = scmp.eq.s32.totalorder %s32, 0
      %p150 = por %p148, %p149
      %p151 = scmp.ne.s32.totalorder %s143, %s145
      %p152 = scmp.eq.s32.totalorder %s37, 3
      %p153 = por %p151, %p152
      %p154 = scmp.ne.s32.totalorder %s145, %s146
      %p155 = scmp.eq.s32.totalorder %s37, 0
      %p156 = por %p154, %p155
      %p157 = scmp.ne.s32.totalorder %s145, %s146
      %p158 = scmp.eq.s32.totalorder %s38, 3
      %p159 = por %p157, %p158
      %p161 = scmp.ne.s32.totalorder %s146, %s160
      %p162 = scmp.eq.s32.totalorder %s38, 0
      %p163 = por %p161, %p162
      %s165 = sadd.s32 %s164, 1
      %p168 = scmp.eq.s32.totalorder %s32, 3
      %p169 = scmp.ne.s32.totalorder %s164, %s166
      %p170 = scmp.eq.s32.totalorder %s32, 0
      %p171 = por %p169, %p170
      %p172 = scmp.ne.s32.totalorder %s164, %s166
      %p173 = scmp.eq.s32.totalorder %s37, 3
      %p174 = por %p172, %p173
      %p175 = scmp.ne.s32.totalorder %s166, %s167
      %p176 = scmp.eq.s32.totalorder %s37, 0
      %p177 = por %p175, %p176
      %p178 = scmp.ne.s32.totalorder %s166, %s167
      %p179 = scmp.eq.s32.totalorder %s38, 3
      %p180 = por %p178, %p179
      %p182 = scmp.ne.s32.totalorder %s167, %s181
      %p183 = scmp.eq.s32.totalorder %s38, 0
      %p184 = por %p182, %p183
      %s186 = sadd.s32 %s185, 1
      %p189 = scmp.eq.s32.totalorder %s32, 3
      %p190 = scmp.ne.s32.totalorder %s185, %s187
      %p191 = scmp.eq.s32.totalorder %s32, 0
      %p192 = por %p190, %p191
      %p193 = scmp.ne.s32.totalorder %s185, %s187
      %p194 = scmp.eq.s32.totalorder %s37, 3
      %p195 = por %p193, %p194
      %p196 = scmp.ne.s32.totalorder %s187, %s188
      %p197 = scmp.eq.s32.totalorder %s37, 0
      %p198 = por %p196, %p197
      %p199 = scmp.ne.s32.totalorder %s187, %s188
      %p200 = scmp.eq.s32.totalorder %s38, 3
      %p201 = por %p199, %p200
      %p203 = scmp.ne.s32.totalorder %s188, %s202
      %p204 = scmp.eq.s32.totalorder %s38, 0
      %p205 = por %p203, %p204
      %s207 = sadd.s32 %s206, 1
      %p210 = scmp.eq.s32.totalorder %s32, 3
      %p211 = scmp.ne.s32.totalorder %s206, %s208
      %p212 = scmp.eq.s32.totalorder %s32, 0
      %p213 = por %p211, %p212
      %p214 = scmp.ne.s32.totalorder %s206, %s208
      %p215 = scmp.eq.s32.totalorder %s37, 3
      %p216 = por %p214, %p215
      %p217 = scmp.ne.s32.totalorder %s208, %s209
      %p218 = scmp.eq.s32.totalorder %s37, 0
      %p219 = por %p217, %p218
      %p220 = scmp.ne.s32.totalorder %s208, %s209
      %p221 = scmp.eq.s32.totalorder %s38, 3
      %p222 = por %p220, %p221
      %p224 = scmp.ne.s32.totalorder %s209, %s223
      %p225 = scmp.eq.s32.totalorder %s38, 0
      %p226 = por %p224, %p225
      %s228 = sadd.s32 %s227, 1
      %p231 = scmp.eq.s32.totalorder %s32, 3
      %p232 = scmp.ne.s32.totalorder %s227, %s229
      %p233 = scmp.eq.s32.totalorder %s32, 0
      %p234 = por %p232, %p233
      %p235 = scmp.ne.s32.totalorder %s227, %s229
      %p236 = scmp.eq.s32.totalorder %s37, 3
      %p237 = por %p235, %p236
      %p238 = scmp.ne.s32.totalorder %s229, %s230
      %p239 = scmp.eq.s32.totalorder %s37, 0
      %p240 = por %p238, %p239
      %p241 = scmp.ne.s32.totalorder %s229, %s230
      %p242 = scmp.eq.s32.totalorder %s38, 3
      %p243 = por %p241, %p242
      %p245 = scmp.ne.s32.totalorder %s230, %s244
      %p246 = scmp.eq.s32.totalorder %s38, 0
      %p247 = por %p245, %p246
      %s249 = sadd.s32 %s248, 1
      %p252 = scmp.eq.s32.totalorder %s32, 3
      %p253 = scmp.ne.s32.totalorder %s248, %s250
      %p254 = scmp.eq.s32.totalorder %s32, 0
      %p255 = por %p253, %p254
      %p256 = scmp.ne.s32.totalorder %s248, %s250
      %p257 = scmp.eq.s32.totalorder %s37, 3
      %p258 = por %p256, %p257
      %p259 = scmp.ne.s32.totalorder %s250, %s251
      %p260 = scmp.eq.s32.totalorder %s37, 0
      %p261 = por %p259, %p260
      %p262 = scmp.ne.s32.totalorder %s250, %s251
      %p263 = scmp.eq.s32.totalorder %s38, 3
      %p264 = por %p262, %p263
      %p266 = scmp.ne.s32.totalorder %s251, %s265
      %p267 = scmp.eq.s32.totalorder %s38, 0
      %p268 = por %p266, %p267
      %s270 = sadd.s32 %s269, 1
      %p273 = scmp.eq.s32.totalorder %s32, 3
      %p274 = scmp.ne.s32.totalorder %s269, %s271
      %p275 = scmp.eq.s32.totalorder %s32, 0
      %p276 = por %p274, %p275
      %p277 = scmp.ne.s32.totalorder %s269, %s271
      %p278 = scmp.eq.s32.totalorder %s37, 3
      %p279 = por %p277, %p278
      %p280 = scmp.ne.s32.totalorder %s271, %s272
      %p281 = scmp.eq.s32.totalorder %s37, 0
      %p282 = por %p280, %p281
      %p283 = scmp.ne.s32.totalorder %s271, %s272
      %p284 = scmp.eq.s32.totalorder %s38, 3
      %p285 = por %p283, %p284
      %p287 = scmp.ne.s32.totalorder %s272, %s286
      %p288 = scmp.eq.s32.totalorder %s38, 0
      %p289 = por %p287, %p288
      %s291 = sadd.s32 %s290, 1
      %p294 = scmp.eq.s32.totalorder %s32, 3
      %p295 = scmp.ne.s32.totalorder %s290, %s292
      %p296 = scmp.eq.s32.totalorder %s32, 0
      %p297 = por %p295, %p296
      %p298 = scmp.ne.s32.totalorder %s290, %s292
      %p299 = scmp.eq.s32.totalorder %s37, 3
      %p300 = por %p298, %p299
      %p301 = scmp.ne.s32.totalorder %s292, %s293
      %p302 = scmp.eq.s32.totalorder %s37, 0
      %p303 = por %p301, %p302
      %p304 = scmp.ne.s32.totalorder %s292, %s293
      %p305 = scmp.eq.s32.totalorder %s38, 3
      %p306 = por %p304, %p305
      %p308 = scmp.ne.s32.totalorder %s293, %s307
      %p309 = scmp.eq.s32.totalorder %s38, 0
      %p310 = por %p308, %p309
      %s312 = sadd.s32 %s311, 1
      %p315 = scmp.eq.s32.totalorder %s32, 3
      %p316 = scmp.ne.s32.totalorder %s311, %s313
      %p317 = scmp.eq.s32.totalorder %s32, 0
      %p318 = por %p316, %p317
      %p319 = scmp.ne.s32.totalorder %s311, %s313
      %p320 = scmp.eq.s32.totalorder %s37, 3
      %p321 = por %p319, %p320
      %p322 = scmp.ne.s32.totalorder %s313, %s314
      %p323 = scmp.eq.s32.totalorder %s37, 0
      %p324 = por %p322, %p323
      %p325 = scmp.ne.s32.totalorder %s313, %s314
      %p326 = scmp.eq.s32.totalorder %s38, 3
      %p327 = por %p325, %p326
      %p329 = scmp.ne.s32.totalorder %s314, %s328
      %p330 = scmp.eq.s32.totalorder %s38, 0
      %p331 = por %p329, %p330
      %s333 = sadd.s32 %s332, 1
      %p336 = scmp.eq.s32.totalorder %s32, 3
      %p337 = scmp.ne.s32.totalorder %s332, %s334
      %p338 = scmp.eq.s32.totalorder %s32, 0
      %p339 = por %p337, %p338
      %p340 = scmp.ne.s32.totalorder %s332, %s334
      %p341 = scmp.eq.s32.totalorder %s37, 3
      %p342 = por %p340, %p341
      %p343 = scmp.ne.s32.totalorder %s334, %s335
      %p344 = scmp.eq.s32.totalorder %s37, 0
      %p345 = por %p343, %p344
      %p346 = scmp.ne.s32.totalorder %s334, %s335
      %p347 = scmp.eq.s32.totalorder %s38, 3
      %p348 = por %p346, %p347
      %p350 = scmp.ne.s32.totalorder %s335, %s349
      %p351 = scmp.eq.s32.totalorder %s38, 0
      %p352 = por %p350, %p351
      %s354 = sadd.s32 %s353, 1
      %p357 = scmp.eq.s32.totalorder %s32, 3
      %p358 = scmp.ne.s32.totalorder %s353, %s355
      %p359 = scmp.eq.s32.totalorder %s32, 0
      %p360 = por %p358, %p359
      %p361 = scmp.ne.s32.totalorder %s353, %s355
      %p362 = scmp.eq.s32.totalorder %s37, 3
      %p363 = por %p361, %p362
      %p364 = scmp.ne.s32.totalorder %s355, %s356
      %p365 = scmp.eq.s32.totalorder %s37, 0
      %p366 = por %p364, %p365
      %p367 = scmp.ne.s32.totalorder %s355, %s356
      %p368 = scmp.eq.s32.totalorder %s38, 3
      %p369 = por %p367, %p368
      %p371 = scmp.ne.s32.totalorder %s356, %s370
      %p372 = scmp.eq.s32.totalorder %s38, 0
      %p373 = por %p371, %p372
      %s375 = sadd.s32 %s374, 1
      %p378 = scmp.eq.s32.totalorder %s32, 3
      %p379 = scmp.ne.s32.totalorder %s374, %s376
      %p380 = scmp.eq.s32.totalorder %s32, 0
      %p381 = por %p379, %p380
      %p382 = scmp.ne.s32.totalorder %s374, %s376
      %p383 = scmp.eq.s32.totalorder %s37, 3
      %p384 = por %p382, %p383
      %p385 = scmp.ne.s32.totalorder %s376, %s377
      %p386 = scmp.eq.s32.totalorder %s37, 0
      %p387 = por %p385, %p386
      %p388 = scmp.ne.s32.totalorder %s376, %s377
      %p389 = scmp.eq.s32.totalorder %s38, 3
      %p390 = por %p388, %p389
      %p392 = scmp.ne.s32.totalorder %s377, %s391
      %p393 = scmp.eq.s32.totalorder %s38, 0
      %p394 = por %p392, %p393
      %s395 = ssub.s32 %s39, %s51
      %p396 = scmp.eq.s32.totalorder %s395, 0
      %s398 = sadd.s32 %s397, 1
      %s399 = scalar_select %p396, %s397, %s398
      %p402 = pneg %p396
      %p403 = scmp.eq.s32.totalorder %s32, 3
      %p404 = por %p402, %p403
      %p405 = scmp.ne.s32.totalorder %s397, %s400
      %p406 = scmp.eq.s32.totalorder %s32, 0
      %p407 = por %p405, %p406
      %p408 = scmp.ne.s32.totalorder %s397, %s400
      %p409 = scmp.eq.s32.totalorder %s37, 3
      %p410 = por %p408, %p409
      %p411 = scmp.ne.s32.totalorder %s400, %s401
      %p412 = scmp.eq.s32.totalorder %s37, 0
      %p413 = por %p411, %p412
      %p414 = scmp.ne.s32.totalorder %s400, %s401
      %p415 = scmp.eq.s32.totalorder %s38, 3
      %p416 = por %p414, %p415
      %p418 = scmp.ne.s32.totalorder %s401, %s417
      %p419 = scmp.eq.s32.totalorder %s38, 0
      %p420 = por %p418, %p419
      %p421 = scmp.le.s32.totalorder 1, %s32
      %p422 = scmp.lt.s32.totalorder %s32, 5
      %p423 = pnand %p421, %p422
      %p424 = pneg %p423
      // Predicated region
      $region9: #{tpu_custom_call.1} parent=5 // pred_check
        _
      $region10: #{tpu_custom_call.1} parent=5 // pred_check_branch
        %426 = sbr.rel (%p423) target = $region12
      $region11: #{tpu_custom_call.1} parent=5 // pred_region
        %s427 = ssub.s32 %s32, 1
        // Predicated region
        $region13: #{tpu_custom_call.1} parent=11 // pred_check
          %p428 = pneg %p93
        $region14: #{tpu_custom_call.1} parent=11 // pred_check_branch
          %430 = sbr.rel (%p428) target = $region16
        $region15: #{tpu_custom_call.1} parent=11 // pred_region
          _
        $region16: #{tpu_custom_call.1} parent=11 // pred_fallthru
          _
        // Predicated region
        $region17: #{tpu_custom_call.1} parent=11 // pred_check
          %p431 = pneg %p114
        $region18: #{tpu_custom_call.1} parent=11 // pred_check_branch
          %433 = sbr.rel (%p431) target = $region20
        $region19: #{tpu_custom_call.1} parent=11 // pred_region
          _
        $region20: #{tpu_custom_call.1} parent=11 // pred_fallthru
          _
        // Predicated region
        $region21: #{tpu_custom_call.1} parent=11 // pred_check
          %p434 = pneg %p135
        $region22: #{tpu_custom_call.1} parent=11 // pred_check_branch
          %436 = sbr.rel (%p434) target = $region24
        $region23: #{tpu_custom_call.1} parent=11 // pred_region
          _
        $region24: #{tpu_custom_call.1} parent=11 // pred_fallthru
          _
        // Predicated region
        $region25: #{tpu_custom_call.1} parent=11 // pred_check
          %p437 = pneg %p156
        $region26: #{tpu_custom_call.1} parent=11 // pred_check_branch
          %439 = sbr.rel (%p437) target = $region28
        $region27: #{tpu_custom_call.1} parent=11 // pred_region
          _
        $region28: #{tpu_custom_call.1} parent=11 // pred_fallthru
          _
        // Predicated region
        $region29: #{tpu_custom_call.1} parent=11 // pred_check
          %p440 = pneg %p177
        $region30: #{tpu_custom_call.1} parent=11 // pred_check_branch
          %442 = sbr.rel (%p440) target = $region32
        $region31: #{tpu_custom_call.1} parent=11 // pred_region
          _
        $region32: #{tpu_custom_call.1} parent=11 // pred_fallthru
          _
        // Predicated region
        $region33: #{tpu_custom_call.1} parent=11 // pred_check
          %p443 = pneg %p198
        $region34: #{tpu_custom_call.1} parent=11 // pred_check_branch
          %445 = sbr.rel (%p443) target = $region36
        $region35: #{tpu_custom_call.1} parent=11 // pred_region
          _
        $region36: #{tpu_custom_call.1} parent=11 // pred_fallthru
          _
        // Predicated region
        $region37: #{tpu_custom_call.1} parent=11 // pred_check
          %p446 = pneg %p219
        $region38: #{tpu_custom_call.1} parent=11 // pred_check_branch
          %448 = sbr.rel (%p446) target = $region40
        $region39: #{tpu_custom_call.1} parent=11 // pred_region
          _
        $region40: #{tpu_custom_call.1} parent=11 // pred_fallthru
          _
        // Predicated region
        $region41: #{tpu_custom_call.1} parent=11 // pred_check
          %p449 = pneg %p240
        $region42: #{tpu_custom_call.1} parent=11 // pred_check_branch
          %451 = sbr.rel (%p449) target = $region44
        $region43: #{tpu_custom_call.1} parent=11 // pred_region
          _
        $region44: #{tpu_custom_call.1} parent=11 // pred_fallthru
          _
        // Predicated region
        $region45: #{tpu_custom_call.1} parent=11 // pred_check
          %p452 = pneg %p261
        $region46: #{tpu_custom_call.1} parent=11 // pred_check_branch
          %454 = sbr.rel (%p452) target = $region48
        $region47: #{tpu_custom_call.1} parent=11 // pred_region
          _
        $region48: #{tpu_custom_call.1} parent=11 // pred_fallthru
          _
        // Predicated region
        $region49: #{tpu_custom_call.1} parent=11 // pred_check
          %p455 = pneg %p282
        $region50: #{tpu_custom_call.1} parent=11 // pred_check_branch
          %457 = sbr.rel (%p455) target = $region52
        $region51: #{tpu_custom_call.1} parent=11 // pred_region
          _
        $region52: #{tpu_custom_call.1} parent=11 // pred_fallthru
          _
        // Predicated region
        $region53: #{tpu_custom_call.1} parent=11 // pred_check
          %p458 = pneg %p303
        $region54: #{tpu_custom_call.1} parent=11 // pred_check_branch
          %460 = sbr.rel (%p458) target = $region56
        $region55: #{tpu_custom_call.1} parent=11 // pred_region
          _
        $region56: #{tpu_custom_call.1} parent=11 // pred_fallthru
          _
        // Predicated region
        $region57: #{tpu_custom_call.1} parent=11 // pred_check
          %p461 = pneg %p324
        $region58: #{tpu_custom_call.1} parent=11 // pred_check_branch
          %463 = sbr.rel (%p461) target = $region60
        $region59: #{tpu_custom_call.1} parent=11 // pred_region
          _
        $region60: #{tpu_custom_call.1} parent=11 // pred_fallthru
          _
        // Predicated region
        $region61: #{tpu_custom_call.1} parent=11 // pred_check
          %p464 = pneg %p345
        $region62: #{tpu_custom_call.1} parent=11 // pred_check_branch
          %466 = sbr.rel (%p464) target = $region64
        $region63: #{tpu_custom_call.1} parent=11 // pred_region
          _
        $region64: #{tpu_custom_call.1} parent=11 // pred_fallthru
          _
        // Predicated region
        $region65: #{tpu_custom_call.1} parent=11 // pred_check
          %p467 = pneg %p366
        $region66: #{tpu_custom_call.1} parent=11 // pred_check_branch
          %469 = sbr.rel (%p467) target = $region68
        $region67: #{tpu_custom_call.1} parent=11 // pred_region
          _
        $region68: #{tpu_custom_call.1} parent=11 // pred_fallthru
          _
        // Predicated region
        $region69: #{tpu_custom_call.1} parent=11 // pred_check
          %p470 = pneg %p387
        $region70: #{tpu_custom_call.1} parent=11 // pred_check_branch
          %472 = sbr.rel (%p470) target = $region72
        $region71: #{tpu_custom_call.1} parent=11 // pred_region
          _
        $region72: #{tpu_custom_call.1} parent=11 // pred_fallthru
          _
      $region12: #{tpu_custom_call.1} parent=5 // pred_fallthru
        _
      %p473 = scmp.lt.s32.totalorder %s32, 4
      // Predicated region
      $region73: #{tpu_custom_call.1} parent=5 // pred_check
        %p474 = pneg %p473
      $region74: #{tpu_custom_call.1} parent=5 // pred_check_branch
        %476 = sbr.rel (%p474) target = $region76
      $region75: #{tpu_custom_call.1} parent=5 // pred_region
        // Predicated region
        $region77: #{tpu_custom_call.1} parent=75 // pred_check
          %p477 = pneg %p66
        $region78: #{tpu_custom_call.1} parent=75 // pred_check_branch
          %479 = sbr.rel (%p477) target = $region80
        $region79: #{tpu_custom_call.1} parent=75 // pred_region
          %p480 = scmp.lt.s32.totalorder %s39, 1
          %s481 = scalar_select %p480, %s39, 1
          %p482 = scmp.lt.s32.totalorder %s40, 1
          %s483 = scalar_select %p482, %s40, 1
          %s484 = smul.addr %s481, 2
          %s485 = sadd.s32 %s483, %s484
          %s486 = smul.addr %s485, 8
          %s487 = scalar_lea.vmem %s1, %s486
        $region80: #{tpu_custom_call.1} parent=75 // pred_fallthru
          _
      $region76: #{tpu_custom_call.1} parent=5 // pred_fallthru
        _
      %p488 = scmp.le.s32.totalorder 1, %s32
      %p489 = scmp.lt.s32.totalorder %s32, 5
      %p490 = pnand %p488, %p489
      %p491 = pneg %p490
      // Predicated region
      $region81: #{tpu_custom_call.1} parent=5 // pred_check
        _
      $region82: #{tpu_custom_call.1} parent=5 // pred_check_branch
        %493 = sbr.rel (%p490) target = $region84
      $region83: #{tpu_custom_call.1} parent=5 // pred_region
        %s494 = ssub.s32 %s32, 1
        %p495 = scmp.lt.s32.totalorder %s41, 1
        %s496 = scalar_select %p495, %s41, 1
        %p497 = scmp.lt.s32.totalorder %s42, 1
        %s498 = scalar_select %p497, %s42, 1
        %s499 = smul.addr %s496, 2
        %s500 = sadd.s32 %s498, %s499
        %s501 = smul.addr %s500, 8
        %s502 = scalar_lea.vmem %s1, %s501
        %p503 = pneg %p72
        %p504 = pneg %p69
        %p505 = pneg %p93
        %p506 = pneg %p90
        %p507 = pneg %p114
        %p508 = pneg %p111
        %p509 = pneg %p135
        %p510 = pneg %p132
        %p511 = pneg %p156
        %p512 = pneg %p153
        %p513 = pneg %p177
        %p514 = pneg %p174
        %p515 = pneg %p198
        %p516 = pneg %p195
        %p517 = pneg %p219
        %p518 = pneg %p216
        %p519 = pneg %p240
        %p520 = pneg %p237
        %p521 = pneg %p261
        %p522 = pneg %p258
        %p523 = pneg %p282
        %p524 = pneg %p279
        %p525 = pneg %p303
        %p526 = pneg %p300
        %p527 = pneg %p324
        %p528 = pneg %p321
        %p529 = pneg %p345
        %p530 = pneg %p342
        %p531 = pneg %p366
        %p532 = pneg %p363
        %p533 = pneg %p387
        %p534 = pneg %p384
        %p535 = pneg %p413
        %p536 = pneg %p410
        %s537 = sand.u32 %s400, 1
        %s538 = scalar_lea.sflag [#allocation6], %s537
        %s539 = sand.u32 %s400, 1
        %s540 = scalar_lea.vmem [#allocation5], %s539
        %p541 = scmp.lt.s32.totalorder %s41, 1
        %s542 = scalar_select %p541, %s41, 1
        %p543 = scmp.lt.s32.totalorder %s42, 1
        %s544 = scalar_select %p543, %s42, 1
        %s545 = smul.addr %s542, 2
        %s546 = sadd.s32 %s544, %s545
        %s547 = smul.addr %s546, 8
        %s548 = scalar_lea.vmem %s1, %s547
        %p550 = scmp.eq.s32.totalorder %s42, 0
        // Predicated region
        $region85: #{tpu_custom_call.1} parent=83 // pred_check
          %p551 = pneg %p550
        $region86: #{tpu_custom_call.1} parent=83 // pred_check_branch
          %553 = sbr.rel (%p551) target = $region88
        $region87: #{tpu_custom_call.1} parent=83 // pred_region
          %554 = vst [vmem:[#allocation2] sm:$0xff] -inf
        $region88: #{tpu_custom_call.1} parent=83 // pred_fallthru
          _
        %v555 = vld [vmem:[%s548] sm:$0xff]
        %v556 = vld [vmem:[%s2] sm:$0x7]
        %558 = vset.pattern.permute.xlu0 0
        %559 = vperm.xlu0 %558, %v555
        %v560 = vpop.permute.xlu0 %559
        %v562 = vlaneseq
        %v563 = vshrl.u32 %v562, 7
        %v564 = vsub.s32 0, %v563
        %v565 = vrot.slane %v556, %v564
        %v566 = vmul.f32 %v560, %v565
        %567 = vset.pattern.permute.xlu0 1
        %568 = vperm.xlu0 %567, %v555
        %v569 = vpop.permute.xlu0 %568
        %v571 = vlaneseq
        %v572 = vshrl.u32 %v571, 7
        %v573 = vsub.s32 1, %v572
        %v574 = vrot.slane %v556, %v573
        %v575 = vmul.f32 %v569, %v574
        %v576 = vadd.f32 %v566, %v575
        %577 = vset.pattern.permute.xlu0 2
        %578 = vperm.xlu0 %577, %v555
        %v579 = vpop.permute.xlu0 %578
        %v581 = vlaneseq
        %v582 = vshrl.u32 %v581, 7
        %v583 = vsub.s32 2, %v582
        %v584 = vrot.slane %v556, %v583
        %v585 = vmul.f32 %v579, %v584
        %v586 = vadd.f32 %v576, %v585
        %v587 = vld [vmem:[%s3] sm:$0x1]
        %v589 = vlaneseq
        %v590 = vshrl.u32 %v589, 7
        %v591 = vsub.s32 0, %v590
        %v592 = vrot.slane %v587, %v591
        %v594 = vadd.f32 %v586, %v592
        %v595 = vmax.f32 %v594, 0.0
        %v596 = vpack.c.bf16 %v595, %v595
        %v597 = vld [vmem:[%s4] sm:$0xf]
        %v598 = vld [vmem:[%s4 + $0x4] sm:$0xf]
        %v599 = vld [vmem:[%s4 + $0x8] sm:$0xf]
        %v600 = vld [vmem:[%s4 + $0xc] sm:$0xf]
        %v601 = vld [vmem:[%s4 + $0x10] sm:$0xf]
        %v602 = vld [vmem:[%s4 + $0x14] sm:$0xf]
        %v603 = vld [vmem:[%s4 + $0x18] sm:$0xf]
        %v604 = vld [vmem:[%s4 + $0x1c] sm:$0xf]
        %v605 = vld [vmem:[%s5] sm:$0x1]
        %v607 = vlaneseq
        %v608 = vshrl.u32 %v607, 7
        %v609 = vsub.s32 0, %v608
        %v610 = vrot.slane %v605, %v609
        %v620 = vunpack.c.l.b16 %v597
        %v621 = vunpack.c.l.b16 %v598
        %v622 = vunpack.c.l.b16 %v599
        %v623 = vunpack.c.l.b16 %v600
        %v624 = vunpack.c.l.b16 %v601
        %v625 = vunpack.c.l.b16 %v602
        %v626 = vunpack.c.l.b16 %v603
        %v627 = vunpack.c.l.b16 %v604
        %v628 = vpack.c.b16 %v621, %v620
        %v629 = vpack.c.b16 %v623, %v622
        %v630 = vpack.c.b16 %v625, %v624
        %v631 = vpack.c.b16 %v627, %v626
        %vm636 = vcmask 523264
        %v638 = vsel %vm636, %v596, 0
        %640 = vmatprep.subr.bf16.mxu0 0
        %641 = vmatpush1.bf16.msra.mxu0 0
        %642 = vmatprep.subr.bf16.mxu0 0
        %643 = vmatpush1.bf16.msra.mxu0 0
        %644 = vmatprep.subr.bf16.mxu0 0
        %645 = vmatpush1.bf16.msra.mxu0 0
        %646 = vmatprep.subr.bf16.mxu0 0
        %647 = vmatpush1.bf16.msra.mxu0 0
        %648 = vmatprep.subr.bf16.mxu0 0
        %649 = vmatpush1.bf16.msra.mxu0 %v631
        %650 = vmatprep.subr.bf16.mxu0 0
        %651 = vmatpush1.bf16.msra.mxu0 %v630
        %652 = vmatprep.subr.bf16.mxu0 0
        %653 = vmatpush1.bf16.msra.mxu0 %v629
        %654 = vmatprep.subr.bf16.mxu0 0
        %655 = vmatpush1.bf16.msra.mxu0 %v628
        %656 = vmatprep.subr.bf16.mxu0 0
        %657 = vmatpush2.bf16.msra.mxu0 0
        %658 = vmatprep.subr.bf16.mxu0 0
        %659 = vmatpush2.bf16.msra.mxu0 0
        %660 = vmatprep.subr.bf16.mxu0 0
        %661 = vmatpush2.bf16.msra.mxu0 0
        %662 = vmatprep.subr.bf16.mxu0 0
        %663 = vmatpush2.bf16.msra.mxu0 0
        %664 = vmatprep.subr.bf16.mxu0 0
        %665 = vmatpush2.bf16.msra.mxu0 0
        %666 = vmatprep.subr.bf16.mxu0 0
        %667 = vmatpush2.bf16.msra.mxu0 0
        %668 = vmatprep.subr.bf16.mxu0 0
        %669 = vmatpush2.bf16.msra.mxu0 0
        %670 = vmatprep.subr.bf16.mxu0 0
        %671 = vmatpush2.bf16.msra.mxu0 0
        %672 = vmatprep.mubr.bf16.mxu0 0
        %673 = vmatmul.mubr.bf16.gmra.mxu0 %v638
        %v674 = vpop.f32.mrf.mxu0
        %v675 = vadd.f32 %v610, %v674
        %v676 = vpop.f32.mrf.mxu0
        %v677 = vpop.f32.mrf.mxu0
        %v678 = vpop.f32.mrf.mxu0
        %679 = vdwg.mxu0
        %v680 = vmax.f32 %v675, 0.0
        %v681 = vld [vmem:[#allocation2] sm:$0xff]
        %v682 = vmax.f32 %v681, %v680
        %683 = vst [vmem:[#allocation2] sm:$0xff] %v682
        %p684 = scmp.eq.s32.totalorder %s42, 1
        // Predicated region
        $region89: #{tpu_custom_call.1} parent=83 // pred_check
          %p685 = pneg %p684
        $region90: #{tpu_custom_call.1} parent=83 // pred_check_branch
          %687 = sbr.rel (%p685) target = $region92
        $region91: #{tpu_custom_call.1} parent=83 // pred_region
          %v688 = vld [vmem:[#allocation2] sm:$0xff]
          %v689 = vrot.slane %v688, 4
          %v690 = vmax.f32 %v688, %v689
          %v691 = vrot.slane %v690, 2
          %v692 = vmax.f32 %v690, %v691
          %v693 = vrot.slane %v692, 1
          %v694 = vmax.f32 %v692, %v693
          %s695 = sld [smem:[#allocation4 + %s41]]
          %v696 = vld [vmem:[%s6] sm:$0x1]
          %v697 = vstv %s695
          %v698 = vmul.f32 %v697, %v696
          %v699 = vld [vmem:[%s7] sm:$0x1]
          %v700 = vadd.f32 %v698, %v699
          %v701 = vmax.f32 %v700, 0.0
          %v702 = vld [vmem:[%s8] sm:$0xff]
          %v703 = vld [vmem:[%s8 + $0x8] sm:$0xff]
          %v704 = vld [vmem:[%s8 + $0x10] sm:$0xff]
          %v705 = vld [vmem:[%s8 + $0x18] sm:$0xff]
          %v706 = vld [vmem:[%s8 + $0x20] sm:$0xff]
          %v707 = vld [vmem:[%s8 + $0x28] sm:$0xff]
          %v708 = vld [vmem:[%s8 + $0x30] sm:$0xff]
          %v709 = vld [vmem:[%s8 + $0x38] sm:$0xff]
          %v710 = vld [vmem:[%s9] sm:$0x1]
          %v712 = vsel %vm636, %v701, 0
          %714 = vmatprep.subr.mxu0 0.0
          %715 = vmatpush1.msra.mxu0 0.0
          %716 = vmatprep.subr.mxu0 0.0
          %717 = vmatpush1.msra.mxu0 0.0
          %718 = vmatprep.subr.mxu0 0.0
          %719 = vmatpush1.msra.mxu0 0.0
          %720 = vmatprep.subr.mxu0 0.0
          %721 = vmatpush1.msra.mxu0 0.0
          %722 = vmatprep.subr.mxu0 0.0
          %723 = vmatpush1.msra.mxu0 0.0
          %724 = vmatprep.subr.mxu0 0.0
          %725 = vmatpush1.msra.mxu0 0.0
          %726 = vmatprep.subr.mxu0 0.0
          %727 = vmatpush1.msra.mxu0 0.0
          %728 = vmatprep.subr.mxu0 0.0
          %729 = vmatpush1.msra.mxu0 0.0
          %730 = vmatprep.subr.mxu0 0.0
          %731 = vmatpush1.msra.mxu0 %v709
          %732 = vmatprep.subr.mxu0 0.0
          %733 = vmatpush1.msra.mxu0 %v708
          %734 = vmatprep.subr.mxu0 0.0
          %735 = vmatpush1.msra.mxu0 %v707
          %736 = vmatprep.subr.mxu0 0.0
          %737 = vmatpush1.msra.mxu0 %v706
          %738 = vmatprep.subr.mxu0 0.0
          %739 = vmatpush1.msra.mxu0 %v705
          %740 = vmatprep.subr.mxu0 0.0
          %741 = vmatpush1.msra.mxu0 %v704
          %742 = vmatprep.subr.mxu0 0.0
          %743 = vmatpush1.msra.mxu0 %v703
          %744 = vmatprep.subr.mxu0 0.0
          %745 = vmatpush1.msra.mxu0 %v702
          %746 = vmatprep.subr.mxu0 0.0
          %747 = vmatpush2.msra.mxu0 0.0
          %748 = vmatprep.subr.mxu0 0.0
          %749 = vmatpush2.msra.mxu0 0.0
          %750 = vmatprep.subr.mxu0 0.0
          %751 = vmatpush2.msra.mxu0 0.0
          %752 = vmatprep.subr.mxu0 0.0
          %753 = vmatpush2.msra.mxu0 0.0
          %754 = vmatprep.subr.mxu0 0.0
          %755 = vmatpush2.msra.mxu0 0.0
          %756 = vmatprep.subr.mxu0 0.0
          %757 = vmatpush2.msra.mxu0 0.0
          %758 = vmatprep.subr.mxu0 0.0
          %759 = vmatpush2.msra.mxu0 0.0
          %760 = vmatprep.subr.mxu0 0.0
          %761 = vmatpush2.msra.mxu0 0.0
          %762 = vmatprep.subr.mxu0 0.0
          %763 = vmatpush2.msra.mxu0 0.0
          %764 = vmatprep.subr.mxu0 0.0
          %765 = vmatpush2.msra.mxu0 0.0
          %766 = vmatprep.subr.mxu0 0.0
          %767 = vmatpush2.msra.mxu0 0.0
          %768 = vmatprep.subr.mxu0 0.0
          %769 = vmatpush2.msra.mxu0 0.0
          %770 = vmatprep.subr.mxu0 0.0
          %771 = vmatpush2.msra.mxu0 0.0
          %772 = vmatprep.subr.mxu0 0.0
          %773 = vmatpush2.msra.mxu0 0.0
          %774 = vmatprep.subr.mxu0 0.0
          %775 = vmatpush2.msra.mxu0 0.0
          %776 = vmatprep.subr.mxu0 0.0
          %777 = vmatpush2.msra.mxu0 0.0
          %778 = vmatprep.mubr.f32.mxu0 0.0
          %779 = vmatmul.mubr.f32.gmra.mxu0 %v712
          %v780 = vpop.f32.mrf.mxu0
          %v781 = vadd.f32 %v710, %v780
          %v782 = vpop.f32.mrf.mxu0
          %783 = vdwg.mxu0
          %v784 = vld [vmem:[%s10] sm:$0xff]
          %v785 = vld [vmem:[%s10 + $0x8] sm:$0xff]
          %v786 = vld [vmem:[%s10 + $0x10] sm:$0xff]
          %v787 = vld [vmem:[%s10 + $0x18] sm:$0xff]
          %v788 = vld [vmem:[%s10 + $0x20] sm:$0xff]
          %v789 = vld [vmem:[%s10 + $0x28] sm:$0xff]
          %v790 = vld [vmem:[%s10 + $0x30] sm:$0xff]
          %v791 = vld [vmem:[%s10 + $0x38] sm:$0xff]
          %v792 = vld [vmem:[%s10 + $0x40] sm:$0xff]
          %v793 = vld [vmem:[%s10 + $0x48] sm:$0xff]
          %v794 = vld [vmem:[%s10 + $0x50] sm:$0xff]
          %v795 = vld [vmem:[%s10 + $0x58] sm:$0xff]
          %v796 = vld [vmem:[%s10 + $0x60] sm:$0xff]
          %v797 = vld [vmem:[%s10 + $0x68] sm:$0xff]
          %v798 = vld [vmem:[%s10 + $0x70] sm:$0xff]
          %v799 = vld [vmem:[%s10 + $0x78] sm:$0xff]
          %v800 = vld [vmem:[%s11] sm:$0xff]
          %v801 = vld [vmem:[%s11 + $0x8] sm:$0xff]
          %v802 = vld [vmem:[%s11 + $0x10] sm:$0xff]
          %v803 = vld [vmem:[%s11 + $0x18] sm:$0xff]
          %v804 = vld [vmem:[%s11 + $0x20] sm:$0xff]
          %v805 = vld [vmem:[%s11 + $0x28] sm:$0xff]
          %v806 = vld [vmem:[%s11 + $0x30] sm:$0xff]
          %v807 = vld [vmem:[%s11 + $0x38] sm:$0xff]
          %v808 = vld [vmem:[%s11 + $0x40] sm:$0xff]
          %v809 = vld [vmem:[%s11 + $0x48] sm:$0xff]
          %v810 = vld [vmem:[%s11 + $0x50] sm:$0xff]
          %v811 = vld [vmem:[%s11 + $0x58] sm:$0xff]
          %v812 = vld [vmem:[%s11 + $0x60] sm:$0xff]
          %v813 = vld [vmem:[%s11 + $0x68] sm:$0xff]
          %v814 = vld [vmem:[%s11 + $0x70] sm:$0xff]
          %v815 = vld [vmem:[%s11 + $0x78] sm:$0xff]
          %816 = vmatprep.subr.mxu0 0.0
          %817 = vmatpush1.msra.mxu0 %v815
          %818 = vmatprep.subr.mxu0 0.0
          %819 = vmatpush1.msra.mxu0 %v814
          %820 = vmatprep.subr.mxu0 0.0
          %821 = vmatpush1.msra.mxu0 %v813
          %822 = vmatprep.subr.mxu0 0.0
          %823 = vmatpush1.msra.mxu0 %v812
          %824 = vmatprep.subr.mxu0 0.0
          %825 = vmatpush1.msra.mxu0 %v811
          %826 = vmatprep.subr.mxu0 0.0
          %827 = vmatpush1.msra.mxu0 %v810
          %828 = vmatprep.subr.mxu0 0.0
          %829 = vmatpush1.msra.mxu0 %v809
          %830 = vmatprep.subr.mxu0 0.0
          %831 = vmatpush1.msra.mxu0 %v808
          %832 = vmatprep.subr.mxu0 0.0
          %833 = vmatpush1.msra.mxu0 %v807
          %834 = vmatprep.subr.mxu0 0.0
          %835 = vmatpush1.msra.mxu0 %v806
          %836 = vmatprep.subr.mxu0 0.0
          %837 = vmatpush1.msra.mxu0 %v805
          %838 = vmatprep.subr.mxu0 0.0
          %839 = vmatpush1.msra.mxu0 %v804
          %840 = vmatprep.subr.mxu0 0.0
          %841 = vmatpush1.msra.mxu0 %v803
          %842 = vmatprep.subr.mxu0 0.0
          %843 = vmatpush1.msra.mxu0 %v802
          %844 = vmatprep.subr.mxu0 0.0
          %845 = vmatpush1.msra.mxu0 %v801
          %846 = vmatprep.subr.mxu0 0.0
          %847 = vmatpush1.msra.mxu0 %v800
          %848 = vmatprep.subr.mxu0 0.0
          %849 = vmatpush2.msra.mxu0 0.0
          %850 = vmatprep.subr.mxu0 0.0
          %851 = vmatpush2.msra.mxu0 0.0
          %852 = vmatprep.subr.mxu0 0.0
          %853 = vmatpush2.msra.mxu0 0.0
          %854 = vmatprep.subr.mxu0 0.0
          %855 = vmatpush2.msra.mxu0 0.0
          %856 = vmatprep.subr.mxu0 0.0
          %857 = vmatpush2.msra.mxu0 0.0
          %858 = vmatprep.subr.mxu0 0.0
          %859 = vmatpush2.msra.mxu0 0.0
          %860 = vmatprep.subr.mxu0 0.0
          %861 = vmatpush2.msra.mxu0 0.0
          %862 = vmatprep.subr.mxu0 0.0
          %863 = vmatpush2.msra.mxu0 0.0
          %864 = vmatprep.subr.mxu0 0.0
          %865 = vmatpush2.msra.mxu0 0.0
          %866 = vmatprep.subr.mxu0 0.0
          %867 = vmatpush2.msra.mxu0 0.0
          %868 = vmatprep.subr.mxu0 0.0
          %869 = vmatpush2.msra.mxu0 0.0
          %870 = vmatprep.subr.mxu0 0.0
          %871 = vmatpush2.msra.mxu0 0.0
          %872 = vmatprep.subr.mxu0 0.0
          %873 = vmatpush2.msra.mxu0 0.0
          %874 = vmatprep.subr.mxu0 0.0
          %875 = vmatpush2.msra.mxu0 0.0
          %876 = vmatprep.subr.mxu0 0.0
          %877 = vmatpush2.msra.mxu0 0.0
          %878 = vmatprep.subr.mxu0 0.0
          %879 = vmatpush2.msra.mxu0 0.0
          %880 = vmatprep.mubr.f32.mxu0 0.0
          %881 = vmatmul.mubr.f32.gmra.mxu0 %v781
          %v882 = vpop.f32.mrf.mxu0
          %v883 = vadd.f32 0.0, %v882
          %v884 = vpop.f32.mrf.mxu0
          %885 = vdwg.mxu0
          %886 = vmatprep.subr.mxu0 0.0
          %887 = vmatpush1.msra.mxu0 %v799
          %888 = vmatprep.subr.mxu0 0.0
          %889 = vmatpush1.msra.mxu0 %v798
          %890 = vmatprep.subr.mxu0 0.0
          %891 = vmatpush1.msra.mxu0 %v797
          %892 = vmatprep.subr.mxu0 0.0
          %893 = vmatpush1.msra.mxu0 %v796
          %894 = vmatprep.subr.mxu0 0.0
          %895 = vmatpush1.msra.mxu0 %v795
          %896 = vmatprep.subr.mxu0 0.0
          %897 = vmatpush1.msra.mxu0 %v794
          %898 = vmatprep.subr.mxu0 0.0
          %899 = vmatpush1.msra.mxu0 %v793
          %900 = vmatprep.subr.mxu0 0.0
          %901 = vmatpush1.msra.mxu0 %v792
          %902 = vmatprep.subr.mxu0 0.0
          %903 = vmatpush1.msra.mxu0 %v791
          %904 = vmatprep.subr.mxu0 0.0
          %905 = vmatpush1.msra.mxu0 %v790
          %906 = vmatprep.subr.mxu0 0.0
          %907 = vmatpush1.msra.mxu0 %v789
          %908 = vmatprep.subr.mxu0 0.0
          %909 = vmatpush1.msra.mxu0 %v788
          %910 = vmatprep.subr.mxu0 0.0
          %911 = vmatpush1.msra.mxu0 %v787
          %912 = vmatprep.subr.mxu0 0.0
          %913 = vmatpush1.msra.mxu0 %v786
          %914 = vmatprep.subr.mxu0 0.0
          %915 = vmatpush1.msra.mxu0 %v785
          %916 = vmatprep.subr.mxu0 0.0
          %917 = vmatpush1.msra.mxu0 %v784
          %918 = vmatprep.subr.mxu0 0.0
          %919 = vmatpush2.msra.mxu0 0.0
          %920 = vmatprep.subr.mxu0 0.0
          %921 = vmatpush2.msra.mxu0 0.0
          %922 = vmatprep.subr.mxu0 0.0
          %923 = vmatpush2.msra.mxu0 0.0
          %924 = vmatprep.subr.mxu0 0.0
          %925 = vmatpush2.msra.mxu0 0.0
          %926 = vmatprep.subr.mxu0 0.0
          %927 = vmatpush2.msra.mxu0 0.0
          %928 = vmatprep.subr.mxu0 0.0
          %929 = vmatpush2.msra.mxu0 0.0
          %930 = vmatprep.subr.mxu0 0.0
          %931 = vmatpush2.msra.mxu0 0.0
          %932 = vmatprep.subr.mxu0 0.0
          %933 = vmatpush2.msra.mxu0 0.0
          %934 = vmatprep.subr.mxu0 0.0
          %935 = vmatpush2.msra.mxu0 0.0
          %936 = vmatprep.subr.mxu0 0.0
          %937 = vmatpush2.msra.mxu0 0.0
          %938 = vmatprep.subr.mxu0 0.0
          %939 = vmatpush2.msra.mxu0 0.0
          %940 = vmatprep.subr.mxu0 0.0
          %941 = vmatpush2.msra.mxu0 0.0
          %942 = vmatprep.subr.mxu0 0.0
          %943 = vmatpush2.msra.mxu0 0.0
          %944 = vmatprep.subr.mxu0 0.0
          %945 = vmatpush2.msra.mxu0 0.0
          %946 = vmatprep.subr.mxu0 0.0
          %947 = vmatpush2.msra.mxu0 0.0
          %948 = vmatprep.subr.mxu0 0.0
          %949 = vmatpush2.msra.mxu0 0.0
          %950 = vmatprep.mubr.f32.mxu0 0.0
          %951 = vmatmul.mubr.f32.gmra.mxu0 %v694
          %v952 = vpop.f32.mrf.mxu0
          %v953 = vadd.f32 %v883, %v952
          %v954 = vpop.f32.mrf.mxu0
          %955 = vdwg.mxu0
          %v956 = vld [vmem:[%s12] sm:$0x1]
          %v957 = vadd.f32 %v953, %v956
          %v958 = vmax.f32 %v957, 0.0
          %v959 = vld [vmem:[%s13] sm:$0xff]
          %v960 = vld [vmem:[%s13 + $0x8] sm:$0xff]
          %v961 = vld [vmem:[%s13 + $0x10] sm:$0xff]
          %v962 = vld [vmem:[%s13 + $0x18] sm:$0xff]
          %v963 = vld [vmem:[%s14] sm:$0x1]
          %vm964 = vcmask 261120
          %v966 = vsel %vm964, %v958, 0
          %968 = vmatprep.subr.mxu0 0.0
          %969 = vmatpush1.msra.mxu0 0.0
          %970 = vmatprep.subr.mxu0 0.0
          %971 = vmatpush1.msra.mxu0 0.0
          %972 = vmatprep.subr.mxu0 0.0
          %973 = vmatpush1.msra.mxu0 0.0
          %974 = vmatprep.subr.mxu0 0.0
          %975 = vmatpush1.msra.mxu0 0.0
          %976 = vmatprep.subr.mxu0 0.0
          %977 = vmatpush1.msra.mxu0 0.0
          %978 = vmatprep.subr.mxu0 0.0
          %979 = vmatpush1.msra.mxu0 0.0
          %980 = vmatprep.subr.mxu0 0.0
          %981 = vmatpush1.msra.mxu0 0.0
          %982 = vmatprep.subr.mxu0 0.0
          %983 = vmatpush1.msra.mxu0 0.0
          %984 = vmatprep.subr.mxu0 0.0
          %985 = vmatpush1.msra.mxu0 0.0
          %986 = vmatprep.subr.mxu0 0.0
          %987 = vmatpush1.msra.mxu0 0.0
          %988 = vmatprep.subr.mxu0 0.0
          %989 = vmatpush1.msra.mxu0 0.0
          %990 = vmatprep.subr.mxu0 0.0
          %991 = vmatpush1.msra.mxu0 0.0
          %992 = vmatprep.subr.mxu0 0.0
          %993 = vmatpush1.msra.mxu0 %v962
          %994 = vmatprep.subr.mxu0 0.0
          %995 = vmatpush1.msra.mxu0 %v961
          %996 = vmatprep.subr.mxu0 0.0
          %997 = vmatpush1.msra.mxu0 %v960
          %998 = vmatprep.subr.mxu0 0.0
          %999 = vmatpush1.msra.mxu0 %v959
          %1000 = vmatprep.subr.mxu0 0.0
          %1001 = vmatpush2.msra.mxu0 0.0
          %1002 = vmatprep.subr.mxu0 0.0
          %1003 = vmatpush2.msra.mxu0 0.0
          %1004 = vmatprep.subr.mxu0 0.0
          %1005 = vmatpush2.msra.mxu0 0.0
          %1006 = vmatprep.subr.mxu0 0.0
          %1007 = vmatpush2.msra.mxu0 0.0
          %1008 = vmatprep.subr.mxu0 0.0
          %1009 = vmatpush2.msra.mxu0 0.0
          %1010 = vmatprep.subr.mxu0 0.0
          %1011 = vmatpush2.msra.mxu0 0.0
          %1012 = vmatprep.subr.mxu0 0.0
          %1013 = vmatpush2.msra.mxu0 0.0
          %1014 = vmatprep.subr.mxu0 0.0
          %1015 = vmatpush2.msra.mxu0 0.0
          %1016 = vmatprep.subr.mxu0 0.0
          %1017 = vmatpush2.msra.mxu0 0.0
          %1018 = vmatprep.subr.mxu0 0.0
          %1019 = vmatpush2.msra.mxu0 0.0
          %1020 = vmatprep.subr.mxu0 0.0
          %1021 = vmatpush2.msra.mxu0 0.0
          %1022 = vmatprep.subr.mxu0 0.0
          %1023 = vmatpush2.msra.mxu0 0.0
          %1024 = vmatprep.subr.mxu0 0.0
          %1025 = vmatpush2.msra.mxu0 0.0
          %1026 = vmatprep.subr.mxu0 0.0
          %1027 = vmatpush2.msra.mxu0 0.0
          %1028 = vmatprep.subr.mxu0 0.0
          %1029 = vmatpush2.msra.mxu0 0.0
          %1030 = vmatprep.subr.mxu0 0.0
          %1031 = vmatpush2.msra.mxu0 0.0
          %1032 = vmatprep.mubr.f32.mxu0 0.0
          %1033 = vmatmul.mubr.f32.gmra.mxu0 %v966
          %v1034 = vpop.f32.mrf.mxu0
          %v1035 = vadd.f32 %v963, %v1034
          %v1036 = vpop.f32.mrf.mxu0
          %1037 = vdwg.mxu0
          %v1038 = vmax.f32 %v1035, 0.0
          %v1039 = vld [vmem:[%s15] sm:$0xff]
          %v1040 = vld [vmem:[%s15 + $0x8] sm:$0xff]
          %v1041 = vld [vmem:[%s15 + $0x10] sm:$0xff]
          %v1042 = vld [vmem:[%s15 + $0x18] sm:$0xff]
          %v1043 = vld [vmem:[%s16] sm:$0x1]
          %v1045 = vsel %vm964, %v1038, 0
          %1047 = vmatprep.subr.mxu0 0.0
          %1048 = vmatpush1.msra.mxu0 0.0
          %1049 = vmatprep.subr.mxu0 0.0
          %1050 = vmatpush1.msra.mxu0 0.0
          %1051 = vmatprep.subr.mxu0 0.0
          %1052 = vmatpush1.msra.mxu0 0.0
          %1053 = vmatprep.subr.mxu0 0.0
          %1054 = vmatpush1.msra.mxu0 0.0
          %1055 = vmatprep.subr.mxu0 0.0
          %1056 = vmatpush1.msra.mxu0 0.0
          %1057 = vmatprep.subr.mxu0 0.0
          %1058 = vmatpush1.msra.mxu0 0.0
          %1059 = vmatprep.subr.mxu0 0.0
          %1060 = vmatpush1.msra.mxu0 0.0
          %1061 = vmatprep.subr.mxu0 0.0
          %1062 = vmatpush1.msra.mxu0 0.0
          %1063 = vmatprep.subr.mxu0 0.0
          %1064 = vmatpush1.msra.mxu0 0.0
          %1065 = vmatprep.subr.mxu0 0.0
          %1066 = vmatpush1.msra.mxu0 0.0
          %1067 = vmatprep.subr.mxu0 0.0
          %1068 = vmatpush1.msra.mxu0 0.0
          %1069 = vmatprep.subr.mxu0 0.0
          %1070 = vmatpush1.msra.mxu0 0.0
          %1071 = vmatprep.subr.mxu0 0.0
          %1072 = vmatpush1.msra.mxu0 %v1042
          %1073 = vmatprep.subr.mxu0 0.0
          %1074 = vmatpush1.msra.mxu0 %v1041
          %1075 = vmatprep.subr.mxu0 0.0
          %1076 = vmatpush1.msra.mxu0 %v1040
          %1077 = vmatprep.subr.mxu0 0.0
          %1078 = vmatpush1.msra.mxu0 %v1039
          %1079 = vmatprep.subr.mxu0 0.0
          %1080 = vmatpush2.msra.mxu0 0.0
          %1081 = vmatprep.subr.mxu0 0.0
          %1082 = vmatpush2.msra.mxu0 0.0
          %1083 = vmatprep.subr.mxu0 0.0
          %1084 = vmatpush2.msra.mxu0 0.0
          %1085 = vmatprep.subr.mxu0 0.0
          %1086 = vmatpush2.msra.mxu0 0.0
          %1087 = vmatprep.subr.mxu0 0.0
          %1088 = vmatpush2.msra.mxu0 0.0
          %1089 = vmatprep.subr.mxu0 0.0
          %1090 = vmatpush2.msra.mxu0 0.0
          %1091 = vmatprep.subr.mxu0 0.0
          %1092 = vmatpush2.msra.mxu0 0.0
          %1093 = vmatprep.subr.mxu0 0.0
          %1094 = vmatpush2.msra.mxu0 0.0
          %1095 = vmatprep.subr.mxu0 0.0
          %1096 = vmatpush2.msra.mxu0 0.0
          %1097 = vmatprep.subr.mxu0 0.0
          %1098 = vmatpush2.msra.mxu0 0.0
          %1099 = vmatprep.subr.mxu0 0.0
          %1100 = vmatpush2.msra.mxu0 0.0
          %1101 = vmatprep.subr.mxu0 0.0
          %1102 = vmatpush2.msra.mxu0 0.0
          %1103 = vmatprep.subr.mxu0 0.0
          %1104 = vmatpush2.msra.mxu0 0.0
          %1105 = vmatprep.subr.mxu0 0.0
          %1106 = vmatpush2.msra.mxu0 0.0
          %1107 = vmatprep.subr.mxu0 0.0
          %1108 = vmatpush2.msra.mxu0 0.0
          %1109 = vmatprep.subr.mxu0 0.0
          %1110 = vmatpush2.msra.mxu0 0.0
          %1111 = vmatprep.mubr.f32.mxu0 0.0
          %1112 = vmatmul.mubr.f32.gmra.mxu0 %v1045
          %v1113 = vpop.f32.mrf.mxu0
          %v1114 = vadd.f32 %v1043, %v1113
          %v1115 = vpop.f32.mrf.mxu0
          %1116 = vdwg.mxu0
          %vm1117 = vcmask 16384
          %1118 = vst.msk [vmem:[%s540] sm:$0x1] %vm1117, %v1114
        $region92: #{tpu_custom_call.1} parent=83 // pred_fallthru
          _
        %s1119 = sand.u32 %s400, 1
        %s1120 = scalar_lea.sflag [#allocation6], %s1119
        %s1121 = sand.u32 %s400, 1
        %s1122 = scalar_lea.vmem [#allocation5], %s1121
        // Predicated region
        $region93: #{tpu_custom_call.1} parent=83 // pred_check
          %p1123 = pneg %p410
        $region94: #{tpu_custom_call.1} parent=83 // pred_check_branch
          %1125 = sbr.rel (%p1123) target = $region96
        $region95: #{tpu_custom_call.1} parent=83 // pred_region
          %s1127 = ssub.s32 16, 16
          %1128 = vsyncadd %s1120, %s1127
          %s1129 = smul.addr %s41, 16
          %s1130 = scalar_lea.hbm %s17, %s1129
          %s1132 = sshll.u32 %s1122, 4
          %s1133 = int_to_ptr.vmem [resolvable:$true] %s1132
          %1135 = dma.vmem_to_hbm [thread:$0]  %s1133, 16, %s1130, %s1120
        $region96: #{tpu_custom_call.1} parent=83 // pred_fallthru
          _
      $region84: #{tpu_custom_call.1} parent=5 // pred_fallthru
        _
      %p1136 = scmp.le.s32.totalorder 2, %s32
      // Predicated region
      $region97: #{tpu_custom_call.1} parent=5 // pred_check
        %p1137 = pneg %p1136
      $region98: #{tpu_custom_call.1} parent=5 // pred_check_branch
        %1139 = sbr.rel (%p1137) target = $region100
      $region99: #{tpu_custom_call.1} parent=5 // pred_region
        %s1140 = ssub.s32 %s32, 2
        // Predicated region
        $region101: #{tpu_custom_call.1} parent=99 // pred_check
          %p1141 = pneg %p416
        $region102: #{tpu_custom_call.1} parent=99 // pred_check_branch
          %1143 = sbr.rel (%p1141) target = $region104
        $region103: #{tpu_custom_call.1} parent=99 // pred_region
          %s1144 = sand.u32 %s401, 1
          %s1145 = scalar_lea.sflag [#allocation6], %s1144
          %s1146 = sand.u32 %s401, 1
          %s1147 = scalar_lea.vmem [#allocation5], %s1146
          %1148 = dma.done %s1145, 16
        $region104: #{tpu_custom_call.1} parent=99 // pred_fallthru
          _
      $region100: #{tpu_custom_call.1} parent=5 // pred_fallthru
        _
    $region6: #{tpu_custom_call.1} parent=1 // loop_footer
      %s36 = sadd.s32 1, %s32
    $region7: #{tpu_custom_call.1} parent=1 // loop_footer_branch
      %31 = sbr.rel target = $region3
    $region8: #{tpu_custom_call.1} parent=1 // loop_exit
      _
    %1149 = vsyncpa [#allocation6], 1
    %s1150 = scalar_lea.sflag [#allocation6], 1
    %1151 = vsyncpa %s1150, 1

</llo_original>
